<compile_context>
chip_gen: v7x
topology: tpu7x:2x2x1
jax: 0.10.0
libtpu: 0.0.40
codegen_flags: <defaults>
</compile_context>

<pallas_src>
import jax
import jax.numpy as jnp
from jax import lax
from jax.experimental import pallas as pl
from jax.experimental.pallas import tpu as pltpu


C1 = 192        # channel width of the NIN block (from the PyTorch module)
C_PAD = 256     # channels zero-padded to a lane/MXU-dense width
KOUT_PAD = 128  # logits zero-padded to a lane-dense store width


def _nin_classifier_kernel(p_ref,                    # (1, HW, 9*Cin)  bf16 im2col patches
                           w1_ref, b1_ref,           # (9*Cin, C_PAD) bf16, (1, C_PAD) f32
                           w2_ref, b2_ref,           # (C_PAD, C_PAD) bf16, (1, C_PAD) f32
                           w3_ref, b3_ref,           # (C_PAD, C_PAD) bf16, (1, C_PAD) f32
                           wf_ref, bf_ref,           # (C_PAD, KOUT_PAD) bf16, (1, KOUT_PAD) f32
                           o_ref):                   # (1, 1, KOUT_PAD) f32
    # --- main_conv (3x3, padding=1): single im2col matmul; BN scale already
    #     folded into w1, so epilogue is shift + ReLU only ---
    p = p_ref[0]                                                     # (HW, 9*Cin)
    y = jnp.dot(p, w1_ref[...], preferred_element_type=jnp.float32)  # (HW, C_PAD)
    y = jnp.maximum(y + b1_ref[...], 0.0)

    # --- mlp_conv1 (1x1 conv == matmul) + shift + ReLU ---
    y = jnp.dot(y.astype(jnp.bfloat16), w2_ref[...],
                preferred_element_type=jnp.float32)
    y = jnp.maximum(y + b2_ref[...], 0.0)

    # --- mlp_conv2 (1x1 conv == matmul) + shift + ReLU ---
    y = jnp.dot(y.astype(jnp.bfloat16), w3_ref[...],
                preferred_element_type=jnp.float32)
    y = jnp.maximum(y + b3_ref[...], 0.0)

    # --- glob_avg_pool + flatten + fc (the 1/(H*W) is folded into wf) ---
    pooled = jnp.sum(y, axis=0, keepdims=True)                       # (1, C_PAD)
    logits = jnp.dot(pooled.astype(jnp.bfloat16), wf_ref[...],
                     preferred_element_type=jnp.float32) + bf_ref[...]
    o_ref[...] = logits.reshape(1, 1, -1)


def conv_classifier_pallas(x_nhwc, kernel_params, out_classes):
    """x_nhwc: (N, H, W, Cin) float32. Returns (N, out_classes) float32."""
    (w1p, b1p, w2p, b2p, w3p, b3p, wfp, bfp) = kernel_params
    N, H, W, Cin = x_nhwc.shape
    HW = H * W
    K9 = 9 * Cin

    # im2col in the wrapper (padding=1, 3x3 window, tap order (dy, dx, cin)
    # matching w1.reshape(9*Cin, C)); cast to bf16 to halve the input DMA.
    x_pad = jnp.pad(x_nhwc, ((0, 0), (1, 1), (1, 1), (0, 0)))
    taps = [x_pad[:, dy:dy + H, dx:dx + W, :]
            for dy in range(3) for dx in range(3)]
    patches = jnp.concatenate(taps, axis=-1).reshape(N, HW, K9)
    patches = patches.astype(jnp.bfloat16)

    def resident(shape):  # weights/shifts: same block every grid step
        return pl.BlockSpec(shape, lambda n: (0, 0))

    out = pl.pallas_call(
        _nin_classifier_kernel,
        out_shape=jax.ShapeDtypeStruct((N, 1, KOUT_PAD), jnp.float32),
        grid=(N,),
        in_specs=[
            pl.BlockSpec((1, HW, K9), lambda n: (n, 0, 0)),     # per-image patches
            resident((K9, C_PAD)), resident((1, C_PAD)),
            resident((C_PAD, C_PAD)), resident((1, C_PAD)),
            resident((C_PAD, C_PAD)), resident((1, C_PAD)),
            resident((C_PAD, KOUT_PAD)), resident((1, KOUT_PAD)),
        ],
        out_specs=pl.BlockSpec((1, 1, KOUT_PAD), lambda n: (n, 0, 0)),
        compiler_params=pltpu.CompilerParams(
            dimension_semantics=("parallel",),
            vmem_limit_bytes=32 * 1024 * 1024),
    )(patches, w1p, b1p, w2p, b2p, w3p, b3p, wfp, bfp)

    return out.reshape(N, KOUT_PAD)[:, :out_classes]


def _fold_bn(conv_bias, gamma, beta, mean, var, eps=1e-5):
    """Fold conv bias + eval-mode BatchNorm into per-channel (scale, shift)."""
    scale = gamma / jnp.sqrt(var + eps)
    shift = beta + scale * (conv_bias - mean)
    return scale, shift


def make_params(key, in_channels, out_classes, c=C1):
    """Semantic (PyTorch-equivalent, eval-mode-BN) parameters."""
    ks = jax.random.split(key, 11)
    f32 = jnp.float32

    w1 = jax.random.normal(ks[0], (3, 3, in_channels, c), f32) * 0.1   # HWIO
    b1c = jax.random.normal(ks[1], (c,), f32) * 0.05
    w2 = jax.random.normal(ks[2], (c, c), f32) * 0.05                  # (in, out)
    b2c = jax.random.normal(ks[3], (c,), f32) * 0.05
    w3 = jax.random.normal(ks[4], (c, c), f32) * 0.05
    b3c = jax.random.normal(ks[5], (c,), f32) * 0.05
    wf = jax.random.normal(ks[6], (c, out_classes), f32) * 0.05
    bf = jax.random.normal(ks[7], (out_classes,), f32) * 0.05

    def bn_params(k):
        ka, kb, kc, kd = jax.random.split(k, 4)
        gamma = 1.0 + 0.1 * jax.random.normal(ka, (c,), f32)
        beta = 0.1 * jax.random.normal(kb, (c,), f32)
        mean = 0.1 * jax.random.normal(kc, (c,), f32)
        var = 1.0 + 0.1 * jnp.abs(jax.random.normal(kd, (c,), f32))
        return gamma, beta, mean, var

    s1, sh1 = _fold_bn(b1c, *bn_params(ks[8]))
    s2, sh2 = _fold_bn(b2c, *bn_params(ks[9]))
    s3, sh3 = _fold_bn(b3c, *bn_params(ks[10]))
    return (w1, s1, sh1, w2, s2, sh2, w3, s3, sh3, wf, bf)


def prepare_kernel_params(params, hw):
    """Fold BN scales into weights, fold 1/(H*W) into wf, zero-pad to
    lane-dense widths, and cast matmul operands to bf16."""
    (w1, s1, b1, w2, s2, b2, w3, s3, b3, wf, bf) = params
    cin, c = w1.shape[2], w1.shape[3]
    kout = wf.shape[1]
    pc, pk = C_PAD - c, KOUT_PAD - kout

    def pad_cols(a, p):
        return jnp.pad(a, ((0, 0), (0, p)))

    w1p = pad_cols((w1 * s1).reshape(9 * cin, c), pc).astype(jnp.bfloat16)
    b1p = pad_cols(b1.reshape(1, c), pc)
    w2p = jnp.pad(w2 * s2[None, :], ((0, pc), (0, pc))).astype(jnp.bfloat16)
    b2p = pad_cols(b2.reshape(1, c), pc)
    w3p = jnp.pad(w3 * s3[None, :], ((0, pc), (0, pc))).astype(jnp.bfloat16)
    b3p = pad_cols(b3.reshape(1, c), pc)
    wfp = jnp.pad(wf / hw, ((0, pc), (0, pk))).astype(jnp.bfloat16)
    bfp = pad_cols(bf.reshape(1, kout), pk)
    return (w1p, b1p, w2p, b2p, w3p, b3p, wfp, bfp)


def reference_jax(x_nhwc, params):
    """Pure-JAX f32 reference of the same forward pass (eval-mode BN)."""
    (w1, s1, b1, w2, s2, b2, w3, s3, b3, wf, bf) = params
    y = lax.conv_general_dilated(
        x_nhwc, w1, window_strides=(1, 1), padding="SAME",
        dimension_numbers=("NHWC", "HWIO", "NHWC"))
    y = jnp.maximum(y * s1 + b1, 0.0)
    y = jnp.einsum("nhwc,cd->nhwd", y, w2)
    y = jnp.maximum(y * s2 + b2, 0.0)
    y = jnp.einsum("nhwc,cd->nhwd", y, w3)
    y = jnp.maximum(y * s3 + b3, 0.0)
    pooled = jnp.mean(y, axis=(1, 2))
    return pooled @ wf + bf


if __name__ == "__main__":
    key = jax.random.PRNGKey(0)
    k_x, k_p = jax.random.split(key)

    N, Cin, H, W = 2, 4, 16, 16
    out_classes = 10

    # PyTorch-style NCHW input, converted to NHWC for the kernel.
    x_nchw = jax.random.normal(k_x, (N, Cin, H, W), jnp.float32)
    x_nhwc = jnp.transpose(x_nchw, (0, 2, 3, 1))

    params = make_params(k_p, Cin, out_classes)
    kparams = prepare_kernel_params(params, H * W)

    out = jax.block_until_ready(conv_classifier_pallas(x_nhwc, kparams, out_classes))
    ref = jax.block_until_ready(reference_jax(x_nhwc, params))

    assert out.shape == (N, out_classes)
    # bf16 matmul operands (f32 accumulation) vs the pure-f32 reference:
    # tolerance loosened accordingly (observed error is ~1e-3).
    assert jnp.allclose(out, ref, rtol=2e-2, atol=2e-2), "mismatch vs JAX reference"

    print("KERNEL_OK")
</pallas_src>

<mosaic_0001>
module attributes {stable_mosaic.version = 11 : i64} {
  func.func @_nin_classifier_kernel(%arg0: i32, %arg1: memref<1x256x36xbf16, #tpu.memory_space<vmem>>, %arg2: memref<36x256xbf16, #tpu.memory_space<vmem>>, %arg3: memref<1x256xf32, #tpu.memory_space<vmem>>, %arg4: memref<256x256xbf16, #tpu.memory_space<vmem>>, %arg5: memref<1x256xf32, #tpu.memory_space<vmem>>, %arg6: memref<256x256xbf16, #tpu.memory_space<vmem>>, %arg7: memref<1x256xf32, #tpu.memory_space<vmem>>, %arg8: memref<256x128xbf16, #tpu.memory_space<vmem>>, %arg9: memref<1x128xf32, #tpu.memory_space<vmem>>, %arg10: memref<1x1x128xf32, #tpu.memory_space<vmem>>) attributes {dimension_semantics = [#tpu.dimension_semantics<parallel>], iteration_bounds = array<i64: 2>, scalar_prefetch = 0 : i64, scratch_operands = 0 : i64, tpu.core_type = #tpu.core_type<tc>, window_params = [{transform_indices = @transform_0, window_bounds = array<i64: 1, 256, 36>}, {pipeline_mode = #tpu.pipeline_mode<synchronous>, transform_indices = @transform_1, window_bounds = array<i64: 36, 256>}, {pipeline_mode = #tpu.pipeline_mode<synchronous>, transform_indices = @transform_2, window_bounds = array<i64: 1, 256>}, {pipeline_mode = #tpu.pipeline_mode<synchronous>, transform_indices = @transform_3, window_bounds = array<i64: 256, 256>}, {pipeline_mode = #tpu.pipeline_mode<synchronous>, transform_indices = @transform_4, window_bounds = array<i64: 1, 256>}, {pipeline_mode = #tpu.pipeline_mode<synchronous>, transform_indices = @transform_5, window_bounds = array<i64: 256, 256>}, {pipeline_mode = #tpu.pipeline_mode<synchronous>, transform_indices = @transform_6, window_bounds = array<i64: 1, 256>}, {pipeline_mode = #tpu.pipeline_mode<synchronous>, transform_indices = @transform_7, window_bounds = array<i64: 256, 128>}, {pipeline_mode = #tpu.pipeline_mode<synchronous>, transform_indices = @transform_8, window_bounds = array<i64: 1, 128>}, {transform_indices = @transform_9, window_bounds = array<i64: 1, 1, 128>}]} {
    %c0 = arith.constant 0 : index
    %c0_0 = arith.constant 0 : index
    %c0_1 = arith.constant 0 : index
    %0 = vector.load %arg1[%c0, %c0_0, %c0_1] : memref<1x256x36xbf16, #tpu.memory_space<vmem>>, vector<1x256x36xbf16>
    %1 = vector.shape_cast %0 : vector<1x256x36xbf16> to vector<256x36xbf16>
    %c0_2 = arith.constant 0 : index
    %c0_3 = arith.constant 0 : index
    %2 = vector.load %arg2[%c0_2, %c0_3] : memref<36x256xbf16, #tpu.memory_space<vmem>>, vector<36x256xbf16>
    %cst = arith.constant dense<0.000000e+00> : vector<256x256xf32>
    %3 = tpu.matmul %1, %2, %cst {dimension_numbers = #tpu.dot_dimension_numbers<[1], [0], [0], [1], [0, 0, 1, 1], [], []>} : vector<256x36xbf16>, vector<36x256xbf16>, vector<256x256xf32> -> vector<256x256xf32>
    %c0_4 = arith.constant 0 : index
    %c0_5 = arith.constant 0 : index
    %4 = vector.load %arg3[%c0_4, %c0_5] : memref<1x256xf32, #tpu.memory_space<vmem>>, vector<1x256xf32>
    %5 = vector.broadcast %4 : vector<1x256xf32> to vector<256x256xf32>
    %6 = arith.addf %3, %5 : vector<256x256xf32>
    %cst_6 = arith.constant 0.000000e+00 : f32
    %7 = vector.broadcast %cst_6 : f32 to vector<256x256xf32>
    %8 = arith.maximumf %6, %7 : vector<256x256xf32>
    %9 = arith.truncf %8 : vector<256x256xf32> to vector<256x256xbf16>
    %c0_7 = arith.constant 0 : index
    %c0_8 = arith.constant 0 : index
    %10 = vector.load %arg4[%c0_7, %c0_8] : memref<256x256xbf16, #tpu.memory_space<vmem>>, vector<256x256xbf16>
    %cst_9 = arith.constant dense<0.000000e+00> : vector<256x256xf32>
    %11 = tpu.matmul %9, %10, %cst_9 {dimension_numbers = #tpu.dot_dimension_numbers<[1], [0], [0], [1], [0, 0, 1, 1], [], []>} : vector<256x256xbf16>, vector<256x256xbf16>, vector<256x256xf32> -> vector<256x256xf32>
    %c0_10 = arith.constant 0 : index
    %c0_11 = arith.constant 0 : index
    %12 = vector.load %arg5[%c0_10, %c0_11] : memref<1x256xf32, #tpu.memory_space<vmem>>, vector<1x256xf32>
    %13 = vector.broadcast %12 : vector<1x256xf32> to vector<256x256xf32>
    %14 = arith.addf %11, %13 : vector<256x256xf32>
    %cst_12 = arith.constant 0.000000e+00 : f32
    %15 = vector.broadcast %cst_12 : f32 to vector<256x256xf32>
    %16 = arith.maximumf %14, %15 : vector<256x256xf32>
    %17 = arith.truncf %16 : vector<256x256xf32> to vector<256x256xbf16>
    %c0_13 = arith.constant 0 : index
    %c0_14 = arith.constant 0 : index
    %18 = vector.load %arg6[%c0_13, %c0_14] : memref<256x256xbf16, #tpu.memory_space<vmem>>, vector<256x256xbf16>
    %cst_15 = arith.constant dense<0.000000e+00> : vector<256x256xf32>
    %19 = tpu.matmul %17, %18, %cst_15 {dimension_numbers = #tpu.dot_dimension_numbers<[1], [0], [0], [1], [0, 0, 1, 1], [], []>} : vector<256x256xbf16>, vector<256x256xbf16>, vector<256x256xf32> -> vector<256x256xf32>
    %c0_16 = arith.constant 0 : index
    %c0_17 = arith.constant 0 : index
    %20 = vector.load %arg7[%c0_16, %c0_17] : memref<1x256xf32, #tpu.memory_space<vmem>>, vector<1x256xf32>
    %21 = vector.broadcast %20 : vector<1x256xf32> to vector<256x256xf32>
    %22 = arith.addf %19, %21 : vector<256x256xf32>
    %cst_18 = arith.constant 0.000000e+00 : f32
    %23 = vector.broadcast %cst_18 : f32 to vector<256x256xf32>
    %24 = arith.maximumf %22, %23 : vector<256x256xf32>
    %cst_19 = arith.constant dense<0.000000e+00> : vector<256xf32>
    %25 = vector.multi_reduction <add>, %24, %cst_19 [0] : vector<256x256xf32> to vector<256xf32>
    %26 = vector.shape_cast %25 : vector<256xf32> to vector<1x256xf32>
    %27 = arith.truncf %26 : vector<1x256xf32> to vector<1x256xbf16>
    %c0_20 = arith.constant 0 : index
    %c0_21 = arith.constant 0 : index
    %28 = vector.load %arg8[%c0_20, %c0_21] : memref<256x128xbf16, #tpu.memory_space<vmem>>, vector<256x128xbf16>
    %cst_22 = arith.constant dense<0.000000e+00> : vector<1x128xf32>
    %29 = tpu.matmul %27, %28, %cst_22 {dimension_numbers = #tpu.dot_dimension_numbers<[1], [0], [0], [1], [0, 0, 1, 1], [], []>} : vector<1x256xbf16>, vector<256x128xbf16>, vector<1x128xf32> -> vector<1x128xf32>
    %c0_23 = arith.constant 0 : index
    %c0_24 = arith.constant 0 : index
    %30 = vector.load %arg9[%c0_23, %c0_24] : memref<1x128xf32, #tpu.memory_space<vmem>>, vector<1x128xf32>
    %31 = arith.addf %29, %30 : vector<1x128xf32>
    %32 = vector.shape_cast %31 : vector<1x128xf32> to vector<1x1x128xf32>
    %c0_25 = arith.constant 0 : index
    %c0_26 = arith.constant 0 : index
    %c0_27 = arith.constant 0 : index
    %33 = vector.load %arg10[%c0_25, %c0_26, %c0_27] : memref<1x1x128xf32, #tpu.memory_space<vmem>>, vector<1x1x128xf32>
    tpu.vector_store %arg10[%c0_25, %c0_26, %c0_27], %32 {strides = array<i32>} : memref<1x1x128xf32, #tpu.memory_space<vmem>>, vector<1x1x128xf32>,
    return
  }
  func.func @transform_0(%arg0: i32) -> (i32, i32, i32) {
    %c0_i32 = arith.constant 0 : i32
    %c0_i32_0 = arith.constant 0 : i32
    %c0_i32_1 = arith.constant 0 : i32
    return %arg0, %c0_i32, %c0_i32_0 : i32, i32, i32
  }
  func.func @transform_1(%arg0: i32) -> (i32, i32) {
    %c0_i32 = arith.constant 0 : i32
    %c0_i32_0 = arith.constant 0 : i32
    %c0_i32_1 = arith.constant 0 : i32
    return %c0_i32, %c0_i32_0 : i32, i32
  }
  func.func @transform_2(%arg0: i32) -> (i32, i32) {
    %c0_i32 = arith.constant 0 : i32
    %c0_i32_0 = arith.constant 0 : i32
    %c0_i32_1 = arith.constant 0 : i32
    return %c0_i32, %c0_i32_0 : i32, i32
  }
  func.func @transform_3(%arg0: i32) -> (i32, i32) {
    %c0_i32 = arith.constant 0 : i32
    %c0_i32_0 = arith.constant 0 : i32
    %c0_i32_1 = arith.constant 0 : i32
    return %c0_i32, %c0_i32_0 : i32, i32
  }
  func.func @transform_4(%arg0: i32) -> (i32, i32) {
    %c0_i32 = arith.constant 0 : i32
    %c0_i32_0 = arith.constant 0 : i32
    %c0_i32_1 = arith.constant 0 : i32
    return %c0_i32, %c0_i32_0 : i32, i32
  }
  func.func @transform_5(%arg0: i32) -> (i32, i32) {
    %c0_i32 = arith.constant 0 : i32
    %c0_i32_0 = arith.constant 0 : i32
    %c0_i32_1 = arith.constant 0 : i32
    return %c0_i32, %c0_i32_0 : i32, i32
  }
  func.func @transform_6(%arg0: i32) -> (i32, i32) {
    %c0_i32 = arith.constant 0 : i32
    %c0_i32_0 = arith.constant 0 : i32
    %c0_i32_1 = arith.constant 0 : i32
    return %c0_i32, %c0_i32_0 : i32, i32
  }
  func.func @transform_7(%arg0: i32) -> (i32, i32) {
    %c0_i32 = arith.constant 0 : i32
    %c0_i32_0 = arith.constant 0 : i32
    %c0_i32_1 = arith.constant 0 : i32
    return %c0_i32, %c0_i32_0 : i32, i32
  }
  func.func @transform_8(%arg0: i32) -> (i32, i32) {
    %c0_i32 = arith.constant 0 : i32
    %c0_i32_0 = arith.constant 0 : i32
    %c0_i32_1 = arith.constant 0 : i32
    return %c0_i32, %c0_i32_0 : i32, i32
  }
  func.func @transform_9(%arg0: i32) -> (i32, i32, i32) {
    %c0_i32 = arith.constant 0 : i32
    %c0_i32_0 = arith.constant 0 : i32
    %c0_i32_1 = arith.constant 0 : i32
    return %arg0, %c0_i32, %c0_i32_0 : i32, i32, i32
  }
}

</mosaic_0001>

<llo_original>
// kernel: tpu_custom_call.1
$region0: #{tpu_custom_call.1}
  #allocation0 [shape = 'u32[]', space=smem, size = 0x4, offset = 0x4, fixed_abs, tag = 'smem constant byte address 0x4 - core index']
  #allocation1 [shape = 'u32[144,128]{1,0:T(1,128)}', space=vmem, size = 0x12000, scoped, tag = 'internal scratch']
  %s0 = inlined_call_operand.vmem [shape: bf16[2,256,36], index: 0, kind: input, shape index: {}]
  %s1 = inlined_call_operand.vmem [shape: bf16[36,256], index: 1, kind: input, shape index: {}]
  %s2 = inlined_call_operand.vmem [shape: f32[1,256], index: 2, kind: input, shape index: {}]
  %s3 = inlined_call_operand.vmem [shape: bf16[256,256], index: 3, kind: input, shape index: {}]
  %s4 = inlined_call_operand.vmem [shape: f32[1,256], index: 4, kind: input, shape index: {}]
  %s5 = inlined_call_operand.hbm [shape: bf16[256,256], index: 5, kind: input, shape index: {}]
  %s6 = inlined_call_operand.vmem [shape: f32[1,256], index: 6, kind: input, shape index: {}]
  %s7 = inlined_call_operand.hbm [shape: bf16[256,128], index: 7, kind: input, shape index: {}]
  %s8 = inlined_call_operand.vmem [shape: f32[1,128], index: 8, kind: input, shape index: {}]
  %s9 = inlined_call_operand.hbm [shape: f32[2,1,128], index: 9, kind: output, shape index: {}]
  %s10 = sld [smem:[#allocation0]]
  $region77: #{tpu_custom_call.1} parent=0
    _
  %s12 = ssub.s32 1, %s10
  %s13 = scalar_select 0, %s12, %s10
  $region1: #{tpu_custom_call.1} parent=0
    #allocation2 [shape = 'u8[131072]{0}', space=vmem, size = 0x20000, scoped, tag = 'input window, operand 5, single buffered']
    #allocation3 [shape = 's32[2]{0}', space=sflag, size = 0x8, scoped, tag = 'scoped memory for tpu_custom_call.1']
    #allocation4 [shape = 's32[2]{0}', space=sflag, size = 0x8, scoped, tag = 'scoped memory for tpu_custom_call.1']
    #allocation5 [shape = 'u8[65536]{0}', space=vmem, size = 0x10000, scoped, tag = 'input window, operand 7, single buffered']
    #allocation6 [shape = 's32[1]{0}', space=sflag, size = 0x4, scoped, tag = 'scoped memory for tpu_custom_call.1']
    #allocation7 [shape = 'u8[1024]{0}', space=vmem, size = 0x400, scoped, tag = 'output window, operand 0']
    %14 = vsyncpa [#allocation3], 0
    %15 = vsyncpa [#allocation6], 0
    %16 = vsyncpa [#allocation4], 0
    %s17 = scalar_lea.sflag [#allocation4], 1
    %18 = vsyncpa %s17, 0
    loop: start=0, step=1, limit=4
    $region2: #{tpu_custom_call.1} parent=1 // loop_pre_header
      _
    $region3: #{tpu_custom_call.1} parent=1 // loop_header
      %s20 = sphi 0, %s24
      %p21 = scmp.ge.s32.totalorder %s20, 4
      %s30 = sphi 0, %s32
      %s33 = sphi 0, %s30
      %s34 = sphi 0, %s33
      %s50 = sphi 0, %s34
      %s54 = sphi 0, %s54
      %s56 = sphi 0, %s54
      %s57 = sphi 0, %s56
      %s71 = sphi 0, %s57
      %s75 = sphi 0, %s75
      %s77 = sphi 0, %s75
      %s78 = sphi 0, %s77
      %s92 = sphi 0, %s78
      %s96 = sphi 0, %s96
      %s98 = sphi 0, %s96
      %s99 = sphi 0, %s98
      %s113 = sphi 0, %s99
      %s117 = sphi 0, %s117
      %s119 = sphi 0, %s117
      %s120 = sphi 0, %s119
      %s134 = sphi 0, %s120
      %s138 = sphi 0, %s138
      %s140 = sphi 0, %s138
      %s141 = sphi 0, %s140
      %s155 = sphi 0, %s141
      %s159 = sphi 0, %s159
      %s161 = sphi 0, %s159
      %s162 = sphi 0, %s161
      %s176 = sphi 0, %s162
      %s180 = sphi 0, %s180
      %s182 = sphi 0, %s180
      %s183 = sphi 0, %s182
      %s197 = sphi 0, %s183
      %s201 = sphi 0, %s201
      %s203 = sphi 0, %s201
      %s204 = sphi 0, %s203
      %s218 = sphi 0, %s204
      %s224 = sphi 0, %s226
      %s227 = sphi 0, %s224
      %s228 = sphi 0, %s227
      %s244 = sphi 0, %s228
    $region4: #{tpu_custom_call.1} parent=1 // loop_header_branch
      %23 = sbr.rel (%p21) target = $region8
    $region5: #{tpu_custom_call.1} parent=1 // loop_body
      %s25 = ssub.s32 %s20, 1
      %s26 = ssub.s32 %s20, 2
      %s27 = sadd.s32 %s20, 1
      %s28 = ssub.s32 %s20, %s27
      %p29 = scmp.eq.s32.totalorder %s28, 0
      %s31 = sadd.s32 %s30, 1
      %s32 = scalar_select %p29, %s30, %s31
      %p35 = pneg %p29
      %p36 = scmp.eq.s32.totalorder %s20, 1
      %p37 = por %p35, %p36
      %p38 = scmp.ne.s32.totalorder %s30, %s33
      %p39 = scmp.eq.s32.totalorder %s20, 0
      %p40 = por %p38, %p39
      %p41 = scmp.ne.s32.totalorder %s30, %s33
      %p42 = scmp.eq.s32.totalorder %s25, 1
      %p43 = por %p41, %p42
      %p44 = scmp.ne.s32.totalorder %s33, %s34
      %p45 = scmp.eq.s32.totalorder %s25, 0
      %p46 = por %p44, %p45
      %p47 = scmp.ne.s32.totalorder %s33, %s34
      %p48 = scmp.eq.s32.totalorder %s26, 1
      %p49 = por %p47, %p48
      %p51 = scmp.ne.s32.totalorder %s34, %s50
      %p52 = scmp.eq.s32.totalorder %s26, 0
      %p53 = por %p51, %p52
      %s55 = sadd.s32 %s54, 1
      %p58 = scmp.eq.s32.totalorder %s20, 1
      %p59 = scmp.ne.s32.totalorder %s54, %s56
      %p60 = scmp.eq.s32.totalorder %s20, 0
      %p61 = por %p59, %p60
      %p62 = scmp.ne.s32.totalorder %s54, %s56
      %p63 = scmp.eq.s32.totalorder %s25, 1
      %p64 = por %p62, %p63
      %p65 = scmp.ne.s32.totalorder %s56, %s57
      %p66 = scmp.eq.s32.totalorder %s25, 0
      %p67 = por %p65, %p66
      %p68 = scmp.ne.s32.totalorder %s56, %s57
      %p69 = scmp.eq.s32.totalorder %s26, 1
      %p70 = por %p68, %p69
      %p72 = scmp.ne.s32.totalorder %s57, %s71
      %p73 = scmp.eq.s32.totalorder %s26, 0
      %p74 = por %p72, %p73
      %s76 = sadd.s32 %s75, 1
      %p79 = scmp.eq.s32.totalorder %s20, 1
      %p80 = scmp.ne.s32.totalorder %s75, %s77
      %p81 = scmp.eq.s32.totalorder %s20, 0
      %p82 = por %p80, %p81
      %p83 = scmp.ne.s32.totalorder %s75, %s77
      %p84 = scmp.eq.s32.totalorder %s25, 1
      %p85 = por %p83, %p84
      %p86 = scmp.ne.s32.totalorder %s77, %s78
      %p87 = scmp.eq.s32.totalorder %s25, 0
      %p88 = por %p86, %p87
      %p89 = scmp.ne.s32.totalorder %s77, %s78
      %p90 = scmp.eq.s32.totalorder %s26, 1
      %p91 = por %p89, %p90
      %p93 = scmp.ne.s32.totalorder %s78, %s92
      %p94 = scmp.eq.s32.totalorder %s26, 0
      %p95 = por %p93, %p94
      %s97 = sadd.s32 %s96, 1
      %p100 = scmp.eq.s32.totalorder %s20, 1
      %p101 = scmp.ne.s32.totalorder %s96, %s98
      %p102 = scmp.eq.s32.totalorder %s20, 0
      %p103 = por %p101, %p102
      %p104 = scmp.ne.s32.totalorder %s96, %s98
      %p105 = scmp.eq.s32.totalorder %s25, 1
      %p106 = por %p104, %p105
      %p107 = scmp.ne.s32.totalorder %s98, %s99
      %p108 = scmp.eq.s32.totalorder %s25, 0
      %p109 = por %p107, %p108
      %p110 = scmp.ne.s32.totalorder %s98, %s99
      %p111 = scmp.eq.s32.totalorder %s26, 1
      %p112 = por %p110, %p111
      %p114 = scmp.ne.s32.totalorder %s99, %s113
      %p115 = scmp.eq.s32.totalorder %s26, 0
      %p116 = por %p114, %p115
      %s118 = sadd.s32 %s117, 1
      %p121 = scmp.eq.s32.totalorder %s20, 1
      %p122 = scmp.ne.s32.totalorder %s117, %s119
      %p123 = scmp.eq.s32.totalorder %s20, 0
      %p124 = por %p122, %p123
      %p125 = scmp.ne.s32.totalorder %s117, %s119
      %p126 = scmp.eq.s32.totalorder %s25, 1
      %p127 = por %p125, %p126
      %p128 = scmp.ne.s32.totalorder %s119, %s120
      %p129 = scmp.eq.s32.totalorder %s25, 0
      %p130 = por %p128, %p129
      %p131 = scmp.ne.s32.totalorder %s119, %s120
      %p132 = scmp.eq.s32.totalorder %s26, 1
      %p133 = por %p131, %p132
      %p135 = scmp.ne.s32.totalorder %s120, %s134
      %p136 = scmp.eq.s32.totalorder %s26, 0
      %p137 = por %p135, %p136
      %s139 = sadd.s32 %s138, 1
      %p142 = scmp.eq.s32.totalorder %s20, 1
      %p143 = scmp.ne.s32.totalorder %s138, %s140
      %p144 = scmp.eq.s32.totalorder %s20, 0
      %p145 = por %p143, %p144
      %p146 = scmp.ne.s32.totalorder %s138, %s140
      %p147 = scmp.eq.s32.totalorder %s25, 1
      %p148 = por %p146, %p147
      %p149 = scmp.ne.s32.totalorder %s140, %s141
      %p150 = scmp.eq.s32.totalorder %s25, 0
      %p151 = por %p149, %p150
      %p152 = scmp.ne.s32.totalorder %s140, %s141
      %p153 = scmp.eq.s32.totalorder %s26, 1
      %p154 = por %p152, %p153
      %p156 = scmp.ne.s32.totalorder %s141, %s155
      %p157 = scmp.eq.s32.totalorder %s26, 0
      %p158 = por %p156, %p157
      %s160 = sadd.s32 %s159, 1
      %p163 = scmp.eq.s32.totalorder %s20, 1
      %p164 = scmp.ne.s32.totalorder %s159, %s161
      %p165 = scmp.eq.s32.totalorder %s20, 0
      %p166 = por %p164, %p165
      %p167 = scmp.ne.s32.totalorder %s159, %s161
      %p168 = scmp.eq.s32.totalorder %s25, 1
      %p169 = por %p167, %p168
      %p170 = scmp.ne.s32.totalorder %s161, %s162
      %p171 = scmp.eq.s32.totalorder %s25, 0
      %p172 = por %p170, %p171
      %p173 = scmp.ne.s32.totalorder %s161, %s162
      %p174 = scmp.eq.s32.totalorder %s26, 1
      %p175 = por %p173, %p174
      %p177 = scmp.ne.s32.totalorder %s162, %s176
      %p178 = scmp.eq.s32.totalorder %s26, 0
      %p179 = por %p177, %p178
      %s181 = sadd.s32 %s180, 1
      %p184 = scmp.eq.s32.totalorder %s20, 1
      %p185 = scmp.ne.s32.totalorder %s180, %s182
      %p186 = scmp.eq.s32.totalorder %s20, 0
      %p187 = por %p185, %p186
      %p188 = scmp.ne.s32.totalorder %s180, %s182
      %p189 = scmp.eq.s32.totalorder %s25, 1
      %p190 = por %p188, %p189
      %p191 = scmp.ne.s32.totalorder %s182, %s183
      %p192 = scmp.eq.s32.totalorder %s25, 0
      %p193 = por %p191, %p192
      %p194 = scmp.ne.s32.totalorder %s182, %s183
      %p195 = scmp.eq.s32.totalorder %s26, 1
      %p196 = por %p194, %p195
      %p198 = scmp.ne.s32.totalorder %s183, %s197
      %p199 = scmp.eq.s32.totalorder %s26, 0
      %p200 = por %p198, %p199
      %s202 = sadd.s32 %s201, 1
      %p205 = scmp.eq.s32.totalorder %s20, 1
      %p206 = scmp.ne.s32.totalorder %s201, %s203
      %p207 = scmp.eq.s32.totalorder %s20, 0
      %p208 = por %p206, %p207
      %p209 = scmp.ne.s32.totalorder %s201, %s203
      %p210 = scmp.eq.s32.totalorder %s25, 1
      %p211 = por %p209, %p210
      %p212 = scmp.ne.s32.totalorder %s203, %s204
      %p213 = scmp.eq.s32.totalorder %s25, 0
      %p214 = por %p212, %p213
      %p215 = scmp.ne.s32.totalorder %s203, %s204
      %p216 = scmp.eq.s32.totalorder %s26, 1
      %p217 = por %p215, %p216
      %p219 = scmp.ne.s32.totalorder %s204, %s218
      %p220 = scmp.eq.s32.totalorder %s26, 0
      %p221 = por %p219, %p220
      %s222 = ssub.s32 %s20, %s27
      %p223 = scmp.eq.s32.totalorder %s222, 0
      %s225 = sadd.s32 %s224, 1
      %s226 = scalar_select %p223, %s224, %s225
      %p229 = pneg %p223
      %p230 = scmp.eq.s32.totalorder %s20, 1
      %p231 = por %p229, %p230
      %p232 = scmp.ne.s32.totalorder %s224, %s227
      %p233 = scmp.eq.s32.totalorder %s20, 0
      %p234 = por %p232, %p233
      %p235 = scmp.ne.s32.totalorder %s224, %s227
      %p236 = scmp.eq.s32.totalorder %s25, 1
      %p237 = por %p235, %p236
      %p238 = scmp.ne.s32.totalorder %s227, %s228
      %p239 = scmp.eq.s32.totalorder %s25, 0
      %p240 = por %p238, %p239
      %p241 = scmp.ne.s32.totalorder %s227, %s228
      %p242 = scmp.eq.s32.totalorder %s26, 1
      %p243 = por %p241, %p242
      %p245 = scmp.ne.s32.totalorder %s228, %s244
      %p246 = scmp.eq.s32.totalorder %s26, 0
      %p247 = por %p245, %p246
      %p248 = scmp.le.s32.totalorder 1, %s20
      %p249 = scmp.lt.s32.totalorder %s20, 3
      %p250 = pnand %p248, %p249
      %p251 = pneg %p250
      // Predicated region
      $region9: #{tpu_custom_call.1} parent=5 // pred_check
        _
      $region10: #{tpu_custom_call.1} parent=5 // pred_check_branch
        %253 = sbr.rel (%p250) target = $region12
      $region11: #{tpu_custom_call.1} parent=5 // pred_region
        %s254 = ssub.s32 %s20, 1
        // Predicated region
        $region13: #{tpu_custom_call.1} parent=11 // pred_check
          %p255 = pneg %p67
        $region14: #{tpu_custom_call.1} parent=11 // pred_check_branch
          %257 = sbr.rel (%p255) target = $region16
        $region15: #{tpu_custom_call.1} parent=11 // pred_region
          _
        $region16: #{tpu_custom_call.1} parent=11 // pred_fallthru
          _
        // Predicated region
        $region17: #{tpu_custom_call.1} parent=11 // pred_check
          %p258 = pneg %p88
        $region18: #{tpu_custom_call.1} parent=11 // pred_check_branch
          %260 = sbr.rel (%p258) target = $region20
        $region19: #{tpu_custom_call.1} parent=11 // pred_region
          _
        $region20: #{tpu_custom_call.1} parent=11 // pred_fallthru
          _
        // Predicated region
        $region21: #{tpu_custom_call.1} parent=11 // pred_check
          %p261 = pneg %p109
        $region22: #{tpu_custom_call.1} parent=11 // pred_check_branch
          %263 = sbr.rel (%p261) target = $region24
        $region23: #{tpu_custom_call.1} parent=11 // pred_region
          _
        $region24: #{tpu_custom_call.1} parent=11 // pred_fallthru
          _
        // Predicated region
        $region25: #{tpu_custom_call.1} parent=11 // pred_check
          %p264 = pneg %p130
        $region26: #{tpu_custom_call.1} parent=11 // pred_check_branch
          %266 = sbr.rel (%p264) target = $region28
        $region27: #{tpu_custom_call.1} parent=11 // pred_region
          _
        $region28: #{tpu_custom_call.1} parent=11 // pred_fallthru
          _
        // Predicated region
        $region29: #{tpu_custom_call.1} parent=11 // pred_check
          %p267 = pneg %p151
        $region30: #{tpu_custom_call.1} parent=11 // pred_check_branch
          %269 = sbr.rel (%p267) target = $region32
        $region31: #{tpu_custom_call.1} parent=11 // pred_region
          %s271 = ssub.s32 4096, 4096
          %272 = vsyncadd [#allocation3], %s271
          %s273 = sshll.u32 [#allocation2], 4
          %s274 = int_to_ptr.vmem [resolvable:$true] %s273
          %279 = dma.hbm_to_vmem [thread:$0]  %s5, 4096, %s274, [#allocation3], 128, 128, 8
        $region32: #{tpu_custom_call.1} parent=11 // pred_fallthru
          _
        // Predicated region
        $region33: #{tpu_custom_call.1} parent=11 // pred_check
          %p280 = pneg %p172
        $region34: #{tpu_custom_call.1} parent=11 // pred_check_branch
          %282 = sbr.rel (%p280) target = $region36
        $region35: #{tpu_custom_call.1} parent=11 // pred_region
          _
        $region36: #{tpu_custom_call.1} parent=11 // pred_fallthru
          _
        // Predicated region
        $region37: #{tpu_custom_call.1} parent=11 // pred_check
          %p283 = pneg %p193
        $region38: #{tpu_custom_call.1} parent=11 // pred_check_branch
          %285 = sbr.rel (%p283) target = $region40
        $region39: #{tpu_custom_call.1} parent=11 // pred_region
          %s287 = ssub.s32 2048, 2048
          %288 = vsyncadd [#allocation6], %s287
          %s289 = sshll.u32 [#allocation5], 4
          %s290 = int_to_ptr.vmem [resolvable:$true] %s289
          %295 = dma.hbm_to_vmem [thread:$0]  %s7, 2048, %s290, [#allocation6], 64, 64, 4
        $region40: #{tpu_custom_call.1} parent=11 // pred_fallthru
          _
        // Predicated region
        $region41: #{tpu_custom_call.1} parent=11 // pred_check
          %p296 = pneg %p214
        $region42: #{tpu_custom_call.1} parent=11 // pred_check_branch
          %298 = sbr.rel (%p296) target = $region44
        $region43: #{tpu_custom_call.1} parent=11 // pred_region
          _
        $region44: #{tpu_custom_call.1} parent=11 // pred_fallthru
          _
      $region12: #{tpu_custom_call.1} parent=5 // pred_fallthru
        _
      %p299 = scmp.lt.s32.totalorder %s20, 2
      // Predicated region
      $region45: #{tpu_custom_call.1} parent=5 // pred_check
        %p300 = pneg %p299
      $region46: #{tpu_custom_call.1} parent=5 // pred_check_branch
        %302 = sbr.rel (%p300) target = $region48
      $region47: #{tpu_custom_call.1} parent=5 // pred_region
        // Predicated region
        $region49: #{tpu_custom_call.1} parent=47 // pred_check
          %p303 = pneg %p40
        $region50: #{tpu_custom_call.1} parent=47 // pred_check_branch
          %305 = sbr.rel (%p303) target = $region52
        $region51: #{tpu_custom_call.1} parent=47 // pred_region
          %p306 = scmp.lt.s32.totalorder %s20, 1
          %s307 = scalar_select %p306, %s20, 1
          %s308 = smul.addr %s307, 32
          %s309 = smul.addr %s308, 4
          %s310 = scalar_lea.vmem %s0, %s309
        $region52: #{tpu_custom_call.1} parent=47 // pred_fallthru
          _
      $region48: #{tpu_custom_call.1} parent=5 // pred_fallthru
        _
      %p311 = scmp.le.s32.totalorder 1, %s20
      %p312 = scmp.lt.s32.totalorder %s20, 3
      %p313 = pnand %p311, %p312
      %p314 = pneg %p313
      // Predicated region
      $region53: #{tpu_custom_call.1} parent=5 // pred_check
        _
      $region54: #{tpu_custom_call.1} parent=5 // pred_check_branch
        %316 = sbr.rel (%p313) target = $region56
      $region55: #{tpu_custom_call.1} parent=5 // pred_region
        %s317 = ssub.s32 %s20, 1
        // Predicated region
        $region57: #{tpu_custom_call.1} parent=55 // pred_check
          %p318 = pneg %p151
        $region58: #{tpu_custom_call.1} parent=55 // pred_check_branch
          %320 = sbr.rel (%p318) target = $region60
        $region59: #{tpu_custom_call.1} parent=55 // pred_region
          %321 = dma.done [#allocation3], 4096
        $region60: #{tpu_custom_call.1} parent=55 // pred_fallthru
          _
        // Predicated region
        $region61: #{tpu_custom_call.1} parent=55 // pred_check
          %p322 = pneg %p193
        $region62: #{tpu_custom_call.1} parent=55 // pred_check_branch
          %324 = sbr.rel (%p322) target = $region64
        $region63: #{tpu_custom_call.1} parent=55 // pred_region
          %325 = dma.done [#allocation6], 2048
        $region64: #{tpu_custom_call.1} parent=55 // pred_fallthru
          _
        %p326 = scmp.lt.s32.totalorder %s25, 1
        %s327 = scalar_select %p326, %s25, 1
        %s328 = smul.addr %s327, 32
        %s329 = smul.addr %s328, 4
        %s330 = scalar_lea.vmem %s0, %s329
        %p331 = pneg %p46
        %p332 = pneg %p43
        %p333 = pneg %p67
        %p334 = pneg %p64
        %p335 = pneg %p88
        %p336 = pneg %p85
        %p337 = pneg %p109
        %p338 = pneg %p106
        %p339 = pneg %p130
        %p340 = pneg %p127
        %p341 = pneg %p151
        %p342 = pneg %p148
        %p343 = pneg %p172
        %p344 = pneg %p169
        %p345 = pneg %p193
        %p346 = pneg %p190
        %p347 = pneg %p214
        %p348 = pneg %p211
        %p349 = pneg %p240
        %p350 = pneg %p237
        %s351 = sand.u32 %s227, 1
        %s352 = scalar_lea.sflag [#allocation4], %s351
        %s353 = sand.u32 %s227, 1
        %s354 = scalar_lea.vmem [#allocation7], %s353
        %p355 = scmp.lt.s32.totalorder %s25, 1
        %s356 = scalar_select %p355, %s25, 1
        %s357 = smul.addr %s356, 32
        %s358 = smul.addr %s357, 4
        %s359 = scalar_lea.vmem %s0, %s358
        %v361 = vld [vmem:[%s359] sm:$0xf]
        %v362 = vld [vmem:[%s359 + $0x4] sm:$0xf]
        %v363 = vld [vmem:[%s359 + $0x8] sm:$0xf]
        %v364 = vld [vmem:[%s359 + $0xc] sm:$0xf]
        %v365 = vld [vmem:[%s359 + $0x10] sm:$0xf]
        %v366 = vld [vmem:[%s359 + $0x14] sm:$0xf]
        %v367 = vld [vmem:[%s359 + $0x18] sm:$0xf]
        %v368 = vld [vmem:[%s359 + $0x1c] sm:$0xf]
        %v369 = vld [vmem:[%s359 + $0x20] sm:$0xf]
        %v370 = vld [vmem:[%s359 + $0x24] sm:$0xf]
        %v371 = vld [vmem:[%s359 + $0x28] sm:$0xf]
        %v372 = vld [vmem:[%s359 + $0x2c] sm:$0xf]
        %v373 = vld [vmem:[%s359 + $0x30] sm:$0xf]
        %v374 = vld [vmem:[%s359 + $0x34] sm:$0xf]
        %v375 = vld [vmem:[%s359 + $0x38] sm:$0xf]
        %v376 = vld [vmem:[%s359 + $0x3c] sm:$0xf]
        %v377 = vld [vmem:[%s359 + $0x40] sm:$0xf]
        %v378 = vld [vmem:[%s359 + $0x44] sm:$0xf]
        %v379 = vld [vmem:[%s359 + $0x48] sm:$0xf]
        %v380 = vld [vmem:[%s359 + $0x4c] sm:$0xf]
        %v381 = vld [vmem:[%s359 + $0x50] sm:$0xf]
        %v382 = vld [vmem:[%s359 + $0x54] sm:$0xf]
        %v383 = vld [vmem:[%s359 + $0x58] sm:$0xf]
        %v384 = vld [vmem:[%s359 + $0x5c] sm:$0xf]
        %v385 = vld [vmem:[%s359 + $0x60] sm:$0xf]
        %v386 = vld [vmem:[%s359 + $0x64] sm:$0xf]
        %v387 = vld [vmem:[%s359 + $0x68] sm:$0xf]
        %v388 = vld [vmem:[%s359 + $0x6c] sm:$0xf]
        %v389 = vld [vmem:[%s359 + $0x70] sm:$0xf]
        %v390 = vld [vmem:[%s359 + $0x74] sm:$0xf]
        %v391 = vld [vmem:[%s359 + $0x78] sm:$0xf]
        %v392 = vld [vmem:[%s359 + $0x7c] sm:$0xf]
        %v393 = vld [vmem:[%s1] sm:$0xff]
        %v394 = vld [vmem:[%s1 + $0x8] sm:$0xff]
        %v395 = vld [vmem:[%s1 + $0x10] sm:$0xff]
        %v396 = vld [vmem:[%s1 + $0x18] sm:$0xff]
        %v397 = vld [vmem:[%s1 + $0x20] sm:$0x33]
        %v398 = vld [vmem:[%s2] sm:$0x3]
        %v400 = vlaneseq
        %v401 = vshrl.u32 %v400, 7
        %v402 = vsub.s32 0, %v401
        %v403 = vrot.slane %v398, %v402
        %v404 = vlaneseq
        %v405 = vshrl.u32 %v404, 7
        %v406 = vsub.s32 1, %v405
        %v407 = vrot.slane %v398, %v406
        %v442 = vunpack.c.l.b16 %v361
        %v443 = vunpack.c.l.b16 %v362
        %v444 = vunpack.c.l.b16 %v363
        %v445 = vunpack.c.l.b16 %v364
        %v446 = vunpack.c.l.b16 %v365
        %v447 = vunpack.c.l.b16 %v366
        %v448 = vunpack.c.l.b16 %v367
        %v449 = vunpack.c.l.b16 %v368
        %v450 = vunpack.c.l.b16 %v369
        %v451 = vunpack.c.l.b16 %v370
        %v452 = vunpack.c.l.b16 %v371
        %v453 = vunpack.c.l.b16 %v372
        %v454 = vunpack.c.l.b16 %v373
        %v455 = vunpack.c.l.b16 %v374
        %v456 = vunpack.c.l.b16 %v375
        %v457 = vunpack.c.l.b16 %v376
        %v458 = vunpack.c.l.b16 %v377
        %v459 = vunpack.c.l.b16 %v378
        %v460 = vunpack.c.l.b16 %v379
        %v461 = vunpack.c.l.b16 %v380
        %v462 = vunpack.c.l.b16 %v381
        %v463 = vunpack.c.l.b16 %v382
        %v464 = vunpack.c.l.b16 %v383
        %v465 = vunpack.c.l.b16 %v384
        %v466 = vunpack.c.l.b16 %v385
        %v467 = vunpack.c.l.b16 %v386
        %v468 = vunpack.c.l.b16 %v387
        %v469 = vunpack.c.l.b16 %v388
        %v470 = vunpack.c.l.b16 %v389
        %v471 = vunpack.c.l.b16 %v390
        %v472 = vunpack.c.l.b16 %v391
        %v473 = vunpack.c.l.b16 %v392
        %v474 = vpack.c.b16 %v443, %v442
        %v475 = vpack.c.b16 %v445, %v444
        %v476 = vpack.c.b16 %v447, %v446
        %v477 = vpack.c.b16 %v449, %v448
        %v478 = vpack.c.b16 %v451, %v450
        %v479 = vpack.c.b16 %v453, %v452
        %v480 = vpack.c.b16 %v455, %v454
        %v481 = vpack.c.b16 %v457, %v456
        %v482 = vpack.c.b16 %v459, %v458
        %v483 = vpack.c.b16 %v461, %v460
        %v484 = vpack.c.b16 %v463, %v462
        %v485 = vpack.c.b16 %v465, %v464
        %v486 = vpack.c.b16 %v467, %v466
        %v487 = vpack.c.b16 %v469, %v468
        %v488 = vpack.c.b16 %v471, %v470
        %v489 = vpack.c.b16 %v473, %v472
        %v495 = vunpack.c.l.b16 %v393
        %v496 = vunpack.c.h.b16 %v393
        %v497 = vunpack.c.l.b16 %v394
        %v498 = vunpack.c.h.b16 %v394
        %v499 = vunpack.c.l.b16 %v395
        %v500 = vunpack.c.h.b16 %v395
        %v501 = vunpack.c.l.b16 %v396
        %v502 = vunpack.c.h.b16 %v396
        %v503 = vunpack.c.l.b16 %v397
        %v504 = vunpack.c.h.b16 %v397
        %v505 = vpack.c.b16 %v497, %v495
        %v506 = vpack.c.b16 %v498, %v496
        %v507 = vpack.c.b16 %v501, %v499
        %v508 = vpack.c.b16 %v502, %v500
        %v509 = vpack.c.b16 %v503, %v503
        %v510 = vpack.c.b16 %v504, %v504
        %vm515 = vcmask 293888
        %v517 = vsel %vm515, %v474, 0
        %v520 = vsel %vm515, %v475, 0
        %v523 = vsel %vm515, %v476, 0
        %v526 = vsel %vm515, %v477, 0
        %v529 = vsel %vm515, %v478, 0
        %v532 = vsel %vm515, %v479, 0
        %v535 = vsel %vm515, %v480, 0
        %v538 = vsel %vm515, %v481, 0
        %v541 = vsel %vm515, %v482, 0
        %v544 = vsel %vm515, %v483, 0
        %v547 = vsel %vm515, %v484, 0
        %v550 = vsel %vm515, %v485, 0
        %v553 = vsel %vm515, %v486, 0
        %v556 = vsel %vm515, %v487, 0
        %v559 = vsel %vm515, %v488, 0
        %v562 = vsel %vm515, %v489, 0
        %vm564 = vcmask 1041408
        %v566 = vsel %vm564, %v509, 0
        %v569 = vsel %vm564, %v510, 0
        %571 = vmatprep.subr.bf16.mxu0 %v506
        %572 = vmatpush1.bf16.msra.mxu0 %v505
        %573 = vmatprep.subr.bf16.mxu0 %v508
        %574 = vmatpush1.bf16.msra.mxu0 %v507
        %575 = vmatprep.subr.bf16.mxu0 %v569
        %576 = vmatpush1.bf16.msra.mxu0 %v566
        %577 = vmatprep.subr.bf16.mxu0 0
        %578 = vmatpush1.bf16.msra.mxu0 0
        %579 = vmatprep.subr.bf16.mxu0 0
        %580 = vmatpush1.bf16.msra.mxu0 0
        %581 = vmatprep.subr.bf16.mxu0 0
        %582 = vmatpush1.bf16.msra.mxu0 0
        %583 = vmatprep.subr.bf16.mxu0 0
        %584 = vmatpush1.bf16.msra.mxu0 0
        %585 = vmatprep.subr.bf16.mxu0 0
        %586 = vmatpush1.bf16.msra.mxu0 0
        %587 = vmatprep.subr.bf16.mxu0 0
        %588 = vmatpush1.bf16.msra.mxu0 0
        %589 = vmatprep.subr.bf16.mxu0 0
        %590 = vmatpush1.bf16.msra.mxu0 0
        %591 = vmatprep.subr.bf16.mxu0 0
        %592 = vmatpush1.bf16.msra.mxu0 0
        %593 = vmatprep.subr.bf16.mxu0 0
        %594 = vmatpush1.bf16.msra.mxu0 0
        %595 = vmatprep.subr.bf16.mxu0 0
        %596 = vmatpush1.bf16.msra.mxu0 0
        %597 = vmatprep.subr.bf16.mxu0 0
        %598 = vmatpush1.bf16.msra.mxu0 0
        %599 = vmatprep.subr.bf16.mxu0 0
        %600 = vmatpush1.bf16.msra.mxu0 0
        %601 = vmatprep.subr.bf16.mxu0 0
        %602 = vmatpush1.bf16.msra.mxu0 0
        %603 = vmatprep.mubr.bf16.mxu0 0
        %604 = vmatmul.mubr.bf16.gmra.mrb[0].mxu0 %v517
        %v605 = vpop.f32.mrb[0].mxu0
        %v606 = vadd.f32 %v403, %v605
        %v607 = vpop.f32.mrb[0].mxu0
        %v608 = vadd.f32 %v407, %v607
        %v609 = vpop.f32.mrb[0].mxu0
        %v610 = vadd.f32 %v403, %v609
        %v611 = vpop.f32.mrb[0].mxu0
        %v612 = vadd.f32 %v407, %v611
        %613 = vmatprep.mubr.bf16.mxu0 0
        %614 = vmatmul.mubr.bf16.gmra.mrb[0].mxu0 %v520
        %v615 = vpop.f32.mrb[0].mxu0
        %v616 = vadd.f32 %v403, %v615
        %v617 = vpop.f32.mrb[0].mxu0
        %v618 = vadd.f32 %v407, %v617
        %v619 = vpop.f32.mrb[0].mxu0
        %v620 = vadd.f32 %v403, %v619
        %v621 = vpop.f32.mrb[0].mxu0
        %v622 = vadd.f32 %v407, %v621
        %623 = vmatprep.mubr.bf16.mxu0 0
        %624 = vmatmul.mubr.bf16.gmra.mrb[0].mxu0 %v523
        %v625 = vpop.f32.mrb[0].mxu0
        %v626 = vadd.f32 %v403, %v625
        %v627 = vpop.f32.mrb[0].mxu0
        %v628 = vadd.f32 %v407, %v627
        %v629 = vpop.f32.mrb[0].mxu0
        %v630 = vadd.f32 %v403, %v629
        %v631 = vpop.f32.mrb[0].mxu0
        %v632 = vadd.f32 %v407, %v631
        %633 = vmatprep.mubr.bf16.mxu0 0
        %634 = vmatmul.mubr.bf16.gmra.mrb[0].mxu0 %v526
        %v635 = vpop.f32.mrb[0].mxu0
        %v636 = vadd.f32 %v403, %v635
        %v637 = vpop.f32.mrb[0].mxu0
        %v638 = vadd.f32 %v407, %v637
        %v639 = vpop.f32.mrb[0].mxu0
        %v640 = vadd.f32 %v403, %v639
        %v641 = vpop.f32.mrb[0].mxu0
        %v642 = vadd.f32 %v407, %v641
        %643 = vmatprep.mubr.bf16.mxu0 0
        %644 = vmatmul.mubr.bf16.gmra.mrb[0].mxu0 %v529
        %v645 = vpop.f32.mrb[0].mxu0
        %v646 = vadd.f32 %v403, %v645
        %v647 = vpop.f32.mrb[0].mxu0
        %v648 = vadd.f32 %v407, %v647
        %v649 = vpop.f32.mrb[0].mxu0
        %v650 = vadd.f32 %v403, %v649
        %v651 = vpop.f32.mrb[0].mxu0
        %v652 = vadd.f32 %v407, %v651
        %653 = vmatprep.mubr.bf16.mxu0 0
        %654 = vmatmul.mubr.bf16.gmra.mrb[0].mxu0 %v532
        %v655 = vpop.f32.mrb[0].mxu0
        %v656 = vadd.f32 %v403, %v655
        %v657 = vpop.f32.mrb[0].mxu0
        %v658 = vadd.f32 %v407, %v657
        %v659 = vpop.f32.mrb[0].mxu0
        %v660 = vadd.f32 %v403, %v659
        %v661 = vpop.f32.mrb[0].mxu0
        %v662 = vadd.f32 %v407, %v661
        %663 = vmatprep.mubr.bf16.mxu0 0
        %664 = vmatmul.mubr.bf16.gmra.mrb[0].mxu0 %v535
        %v665 = vpop.f32.mrb[0].mxu0
        %v666 = vadd.f32 %v403, %v665
        %v667 = vpop.f32.mrb[0].mxu0
        %v668 = vadd.f32 %v407, %v667
        %v669 = vpop.f32.mrb[0].mxu0
        %v670 = vadd.f32 %v403, %v669
        %v671 = vpop.f32.mrb[0].mxu0
        %v672 = vadd.f32 %v407, %v671
        %673 = vmatprep.mubr.bf16.mxu0 0
        %674 = vmatmul.mubr.bf16.gmra.mrb[0].mxu0 %v538
        %v675 = vpop.f32.mrb[0].mxu0
        %v676 = vadd.f32 %v403, %v675
        %v677 = vpop.f32.mrb[0].mxu0
        %v678 = vadd.f32 %v407, %v677
        %v679 = vpop.f32.mrb[0].mxu0
        %v680 = vadd.f32 %v403, %v679
        %v681 = vpop.f32.mrb[0].mxu0
        %v682 = vadd.f32 %v407, %v681
        %683 = vmatprep.mubr.bf16.mxu0 0
        %684 = vmatmul.mubr.bf16.gmra.mrb[0].mxu0 %v541
        %v685 = vpop.f32.mrb[0].mxu0
        %v686 = vadd.f32 %v403, %v685
        %v687 = vpop.f32.mrb[0].mxu0
        %v688 = vadd.f32 %v407, %v687
        %v689 = vpop.f32.mrb[0].mxu0
        %v690 = vadd.f32 %v403, %v689
        %v691 = vpop.f32.mrb[0].mxu0
        %v692 = vadd.f32 %v407, %v691
        %693 = vmatprep.mubr.bf16.mxu0 0
        %694 = vmatmul.mubr.bf16.gmra.mrb[0].mxu0 %v544
        %v695 = vpop.f32.mrb[0].mxu0
        %v696 = vadd.f32 %v403, %v695
        %v697 = vpop.f32.mrb[0].mxu0
        %v698 = vadd.f32 %v407, %v697
        %v699 = vpop.f32.mrb[0].mxu0
        %v700 = vadd.f32 %v403, %v699
        %v701 = vpop.f32.mrb[0].mxu0
        %v702 = vadd.f32 %v407, %v701
        %703 = vmatprep.mubr.bf16.mxu0 0
        %704 = vmatmul.mubr.bf16.gmra.mrb[0].mxu0 %v547
        %v705 = vpop.f32.mrb[0].mxu0
        %v706 = vadd.f32 %v403, %v705
        %v707 = vpop.f32.mrb[0].mxu0
        %v708 = vadd.f32 %v407, %v707
        %v709 = vpop.f32.mrb[0].mxu0
        %v710 = vadd.f32 %v403, %v709
        %v711 = vpop.f32.mrb[0].mxu0
        %v712 = vadd.f32 %v407, %v711
        %713 = vmatprep.mubr.bf16.mxu0 0
        %714 = vmatmul.mubr.bf16.gmra.mrb[0].mxu0 %v550
        %v715 = vpop.f32.mrb[0].mxu0
        %v716 = vadd.f32 %v403, %v715
        %v717 = vpop.f32.mrb[0].mxu0
        %v718 = vadd.f32 %v407, %v717
        %v719 = vpop.f32.mrb[0].mxu0
        %v720 = vadd.f32 %v403, %v719
        %v721 = vpop.f32.mrb[0].mxu0
        %v722 = vadd.f32 %v407, %v721
        %723 = vmatprep.mubr.bf16.mxu0 0
        %724 = vmatmul.mubr.bf16.gmra.mrb[0].mxu0 %v553
        %v725 = vpop.f32.mrb[0].mxu0
        %v726 = vadd.f32 %v403, %v725
        %v727 = vpop.f32.mrb[0].mxu0
        %v728 = vadd.f32 %v407, %v727
        %v729 = vpop.f32.mrb[0].mxu0
        %v730 = vadd.f32 %v403, %v729
        %v731 = vpop.f32.mrb[0].mxu0
        %v732 = vadd.f32 %v407, %v731
        %733 = vmatprep.mubr.bf16.mxu0 0
        %734 = vmatmul.mubr.bf16.gmra.mrb[0].mxu0 %v556
        %v735 = vpop.f32.mrb[0].mxu0
        %v736 = vadd.f32 %v403, %v735
        %v737 = vpop.f32.mrb[0].mxu0
        %v738 = vadd.f32 %v407, %v737
        %v739 = vpop.f32.mrb[0].mxu0
        %v740 = vadd.f32 %v403, %v739
        %v741 = vpop.f32.mrb[0].mxu0
        %v742 = vadd.f32 %v407, %v741
        %743 = vmatprep.mubr.bf16.mxu0 0
        %744 = vmatmul.mubr.bf16.gmra.mrb[0].mxu0 %v559
        %v745 = vpop.f32.mrb[0].mxu0
        %v746 = vadd.f32 %v403, %v745
        %v747 = vpop.f32.mrb[0].mxu0
        %v748 = vadd.f32 %v407, %v747
        %v749 = vpop.f32.mrb[0].mxu0
        %v750 = vadd.f32 %v403, %v749
        %v751 = vpop.f32.mrb[0].mxu0
        %v752 = vadd.f32 %v407, %v751
        %753 = vmatprep.mubr.bf16.mxu0 0
        %754 = vmatmul.mubr.bf16.gmra.mrb[0].mxu0 %v562
        %v755 = vpop.f32.mrb[0].mxu0
        %v756 = vadd.f32 %v403, %v755
        %v757 = vpop.f32.mrb[0].mxu0
        %v758 = vadd.f32 %v407, %v757
        %v759 = vpop.f32.mrb[0].mxu0
        %v760 = vadd.f32 %v403, %v759
        %v761 = vpop.f32.mrb[0].mxu0
        %v762 = vadd.f32 %v407, %v761
        %763 = vdwg.mxu0
        %v764 = vmax.f32 %v606, 0.0
        %v765 = vmax.f32 %v608, 0.0
        %v766 = vmax.f32 %v610, 0.0
        %v767 = vmax.f32 %v612, 0.0
        %v768 = vmax.f32 %v616, 0.0
        %v769 = vmax.f32 %v618, 0.0
        %v770 = vmax.f32 %v620, 0.0
        %v771 = vmax.f32 %v622, 0.0
        %v772 = vmax.f32 %v626, 0.0
        %v773 = vmax.f32 %v628, 0.0
        %v774 = vmax.f32 %v630, 0.0
        %v775 = vmax.f32 %v632, 0.0
        %v776 = vmax.f32 %v636, 0.0
        %v777 = vmax.f32 %v638, 0.0
        %v778 = vmax.f32 %v640, 0.0
        %v779 = vmax.f32 %v642, 0.0
        %v780 = vmax.f32 %v646, 0.0
        %v781 = vmax.f32 %v648, 0.0
        %v782 = vmax.f32 %v650, 0.0
        %v783 = vmax.f32 %v652, 0.0
        %v784 = vmax.f32 %v656, 0.0
        %v785 = vmax.f32 %v658, 0.0
        %v786 = vmax.f32 %v660, 0.0
        %v787 = vmax.f32 %v662, 0.0
        %v788 = vmax.f32 %v666, 0.0
        %v789 = vmax.f32 %v668, 0.0
        %v790 = vmax.f32 %v670, 0.0
        %v791 = vmax.f32 %v672, 0.0
        %v792 = vmax.f32 %v676, 0.0
        %v793 = vmax.f32 %v678, 0.0
        %v794 = vmax.f32 %v680, 0.0
        %v795 = vmax.f32 %v682, 0.0
        %v796 = vmax.f32 %v686, 0.0
        %v797 = vmax.f32 %v688, 0.0
        %v798 = vmax.f32 %v690, 0.0
        %v799 = vmax.f32 %v692, 0.0
        %v800 = vmax.f32 %v696, 0.0
        %v801 = vmax.f32 %v698, 0.0
        %v802 = vmax.f32 %v700, 0.0
        %v803 = vmax.f32 %v702, 0.0
        %v804 = vmax.f32 %v706, 0.0
        %v805 = vmax.f32 %v708, 0.0
        %v806 = vmax.f32 %v710, 0.0
        %v807 = vmax.f32 %v712, 0.0
        %v808 = vmax.f32 %v716, 0.0
        %v809 = vmax.f32 %v718, 0.0
        %v810 = vmax.f32 %v720, 0.0
        %v811 = vmax.f32 %v722, 0.0
        %v812 = vmax.f32 %v726, 0.0
        %v813 = vmax.f32 %v728, 0.0
        %v814 = vmax.f32 %v730, 0.0
        %v815 = vmax.f32 %v732, 0.0
        %v816 = vmax.f32 %v736, 0.0
        %v817 = vmax.f32 %v738, 0.0
        %v818 = vmax.f32 %v740, 0.0
        %v819 = vmax.f32 %v742, 0.0
        %v820 = vmax.f32 %v746, 0.0
        %v821 = vmax.f32 %v748, 0.0
        %v822 = vmax.f32 %v750, 0.0
        %v823 = vmax.f32 %v752, 0.0
        %v824 = vmax.f32 %v756, 0.0
        %v825 = vmax.f32 %v758, 0.0
        %v826 = vmax.f32 %v760, 0.0
        %v827 = vmax.f32 %v762, 0.0
        %v828 = vpack.c.bf16 %v766, %v764
        %v829 = vpack.c.bf16 %v767, %v765
        %v830 = vpack.c.bf16 %v770, %v768
        %v831 = vpack.c.bf16 %v771, %v769
        %v832 = vpack.c.bf16 %v774, %v772
        %v833 = vpack.c.bf16 %v775, %v773
        %v834 = vpack.c.bf16 %v778, %v776
        %v835 = vpack.c.bf16 %v779, %v777
        %v836 = vpack.c.bf16 %v782, %v780
        %v837 = vpack.c.bf16 %v783, %v781
        %v838 = vpack.c.bf16 %v786, %v784
        %v839 = vpack.c.bf16 %v787, %v785
        %v840 = vpack.c.bf16 %v790, %v788
        %v841 = vpack.c.bf16 %v791, %v789
        %v842 = vpack.c.bf16 %v794, %v792
        %v843 = vpack.c.bf16 %v795, %v793
        %v844 = vpack.c.bf16 %v798, %v796
        %v845 = vpack.c.bf16 %v799, %v797
        %v846 = vpack.c.bf16 %v802, %v800
        %v847 = vpack.c.bf16 %v803, %v801
        %v848 = vpack.c.bf16 %v806, %v804
        %v849 = vpack.c.bf16 %v807, %v805
        %v850 = vpack.c.bf16 %v810, %v808
        %v851 = vpack.c.bf16 %v811, %v809
        %v852 = vpack.c.bf16 %v814, %v812
        %v853 = vpack.c.bf16 %v815, %v813
        %v854 = vpack.c.bf16 %v818, %v816
        %v855 = vpack.c.bf16 %v819, %v817
        %v856 = vpack.c.bf16 %v822, %v820
        %v857 = vpack.c.bf16 %v823, %v821
        %v858 = vpack.c.bf16 %v826, %v824
        %v859 = vpack.c.bf16 %v827, %v825
        %v860 = vld [vmem:[%s3] sm:$0xff]
        %v861 = vld [vmem:[%s3 + $0x8] sm:$0xff]
        %v862 = vld [vmem:[%s3 + $0x10] sm:$0xff]
        %v863 = vld [vmem:[%s3 + $0x18] sm:$0xff]
        %v864 = vld [vmem:[%s3 + $0x20] sm:$0xff]
        %v865 = vld [vmem:[%s3 + $0x28] sm:$0xff]
        %v866 = vld [vmem:[%s3 + $0x30] sm:$0xff]
        %v867 = vld [vmem:[%s3 + $0x38] sm:$0xff]
        %v868 = vld [vmem:[%s3 + $0x40] sm:$0xff]
        %v869 = vld [vmem:[%s3 + $0x48] sm:$0xff]
        %v870 = vld [vmem:[%s3 + $0x50] sm:$0xff]
        %v871 = vld [vmem:[%s3 + $0x58] sm:$0xff]
        %v872 = vld [vmem:[%s3 + $0x60] sm:$0xff]
        %v873 = vld [vmem:[%s3 + $0x68] sm:$0xff]
        %v874 = vld [vmem:[%s3 + $0x70] sm:$0xff]
        %v875 = vld [vmem:[%s3 + $0x78] sm:$0xff]
        %v876 = vld [vmem:[%s3 + $0x80] sm:$0xff]
        %v877 = vld [vmem:[%s3 + $0x88] sm:$0xff]
        %v878 = vld [vmem:[%s3 + $0x90] sm:$0xff]
        %v879 = vld [vmem:[%s3 + $0x98] sm:$0xff]
        %v880 = vld [vmem:[%s3 + $0xa0] sm:$0xff]
        %v881 = vld [vmem:[%s3 + $0xa8] sm:$0xff]
        %v882 = vld [vmem:[%s3 + $0xb0] sm:$0xff]
        %v883 = vld [vmem:[%s3 + $0xb8] sm:$0xff]
        %v884 = vld [vmem:[%s3 + $0xc0] sm:$0xff]
        %v885 = vld [vmem:[%s3 + $0xc8] sm:$0xff]
        %v886 = vld [vmem:[%s3 + $0xd0] sm:$0xff]
        %v887 = vld [vmem:[%s3 + $0xd8] sm:$0xff]
        %v888 = vld [vmem:[%s3 + $0xe0] sm:$0xff]
        %v889 = vld [vmem:[%s3 + $0xe8] sm:$0xff]
        %v890 = vld [vmem:[%s3 + $0xf0] sm:$0xff]
        %v891 = vld [vmem:[%s3 + $0xf8] sm:$0xff]
        %v892 = vld [vmem:[%s4] sm:$0x3]
        %v894 = vlaneseq
        %v895 = vshrl.u32 %v894, 7
        %v896 = vsub.s32 0, %v895
        %v897 = vrot.slane %v892, %v896
        %v898 = vlaneseq
        %v899 = vshrl.u32 %v898, 7
        %v900 = vsub.s32 1, %v899
        %v901 = vrot.slane %v892, %v900
        %v936 = vunpack.c.l.b16 %v860
        %v937 = vunpack.c.h.b16 %v860
        %v938 = vunpack.c.l.b16 %v861
        %v939 = vunpack.c.h.b16 %v861
        %v940 = vunpack.c.l.b16 %v862
        %v941 = vunpack.c.h.b16 %v862
        %v942 = vunpack.c.l.b16 %v863
        %v943 = vunpack.c.h.b16 %v863
        %v944 = vunpack.c.l.b16 %v864
        %v945 = vunpack.c.h.b16 %v864
        %v946 = vunpack.c.l.b16 %v865
        %v947 = vunpack.c.h.b16 %v865
        %v948 = vunpack.c.l.b16 %v866
        %v949 = vunpack.c.h.b16 %v866
        %v950 = vunpack.c.l.b16 %v867
        %v951 = vunpack.c.h.b16 %v867
        %v952 = vunpack.c.l.b16 %v868
        %v953 = vunpack.c.h.b16 %v868
        %v954 = vunpack.c.l.b16 %v869
        %v955 = vunpack.c.h.b16 %v869
        %v956 = vunpack.c.l.b16 %v870
        %v957 = vunpack.c.h.b16 %v870
        %v958 = vunpack.c.l.b16 %v871
        %v959 = vunpack.c.h.b16 %v871
        %v960 = vunpack.c.l.b16 %v872
        %v961 = vunpack.c.h.b16 %v872
        %v962 = vunpack.c.l.b16 %v873
        %v963 = vunpack.c.h.b16 %v873
        %v964 = vunpack.c.l.b16 %v874
        %v965 = vunpack.c.h.b16 %v874
        %v966 = vunpack.c.l.b16 %v875
        %v967 = vunpack.c.h.b16 %v875
        %v968 = vunpack.c.l.b16 %v876
        %v969 = vunpack.c.h.b16 %v876
        %v970 = vunpack.c.l.b16 %v877
        %v971 = vunpack.c.h.b16 %v877
        %v972 = vunpack.c.l.b16 %v878
        %v973 = vunpack.c.h.b16 %v878
        %v974 = vunpack.c.l.b16 %v879
        %v975 = vunpack.c.h.b16 %v879
        %v976 = vunpack.c.l.b16 %v880
        %v977 = vunpack.c.h.b16 %v880
        %v978 = vunpack.c.l.b16 %v881
        %v979 = vunpack.c.h.b16 %v881
        %v980 = vunpack.c.l.b16 %v882
        %v981 = vunpack.c.h.b16 %v882
        %v982 = vunpack.c.l.b16 %v883
        %v983 = vunpack.c.h.b16 %v883
        %v984 = vunpack.c.l.b16 %v884
        %v985 = vunpack.c.h.b16 %v884
        %v986 = vunpack.c.l.b16 %v885
        %v987 = vunpack.c.h.b16 %v885
        %v988 = vunpack.c.l.b16 %v886
        %v989 = vunpack.c.h.b16 %v886
        %v990 = vunpack.c.l.b16 %v887
        %v991 = vunpack.c.h.b16 %v887
        %v992 = vunpack.c.l.b16 %v888
        %v993 = vunpack.c.h.b16 %v888
        %v994 = vunpack.c.l.b16 %v889
        %v995 = vunpack.c.h.b16 %v889
        %v996 = vunpack.c.l.b16 %v890
        %v997 = vunpack.c.h.b16 %v890
        %v998 = vunpack.c.l.b16 %v891
        %v999 = vunpack.c.h.b16 %v891
        %v1000 = vpack.c.b16 %v938, %v936
        %v1001 = vpack.c.b16 %v939, %v937
        %v1002 = vpack.c.b16 %v942, %v940
        %v1003 = vpack.c.b16 %v943, %v941
        %v1004 = vpack.c.b16 %v946, %v944
        %v1005 = vpack.c.b16 %v947, %v945
        %v1006 = vpack.c.b16 %v950, %v948
        %v1007 = vpack.c.b16 %v951, %v949
        %v1008 = vpack.c.b16 %v954, %v952
        %v1009 = vpack.c.b16 %v955, %v953
        %v1010 = vpack.c.b16 %v958, %v956
        %v1011 = vpack.c.b16 %v959, %v957
        %v1012 = vpack.c.b16 %v962, %v960
        %v1013 = vpack.c.b16 %v963, %v961
        %v1014 = vpack.c.b16 %v966, %v964
        %v1015 = vpack.c.b16 %v967, %v965
        %v1016 = vpack.c.b16 %v970, %v968
        %v1017 = vpack.c.b16 %v971, %v969
        %v1018 = vpack.c.b16 %v974, %v972
        %v1019 = vpack.c.b16 %v975, %v973
        %v1020 = vpack.c.b16 %v978, %v976
        %v1021 = vpack.c.b16 %v979, %v977
        %v1022 = vpack.c.b16 %v982, %v980
        %v1023 = vpack.c.b16 %v983, %v981
        %v1024 = vpack.c.b16 %v986, %v984
        %v1025 = vpack.c.b16 %v987, %v985
        %v1026 = vpack.c.b16 %v990, %v988
        %v1027 = vpack.c.b16 %v991, %v989
        %v1028 = vpack.c.b16 %v994, %v992
        %v1029 = vpack.c.b16 %v995, %v993
        %v1030 = vpack.c.b16 %v998, %v996
        %v1031 = vpack.c.b16 %v999, %v997
        %1064 = vmatprep.subr.bf16.mxu0 %v1001
        %1065 = vmatpush1.bf16.msra.mxu0 %v1000
        %1066 = vmatprep.subr.bf16.mxu0 %v1003
        %1067 = vmatpush1.bf16.msra.mxu0 %v1002
        %1068 = vmatprep.subr.bf16.mxu0 %v1005
        %1069 = vmatpush1.bf16.msra.mxu0 %v1004
        %1070 = vmatprep.subr.bf16.mxu0 %v1007
        %1071 = vmatpush1.bf16.msra.mxu0 %v1006
        %1072 = vmatprep.subr.bf16.mxu0 %v1009
        %1073 = vmatpush1.bf16.msra.mxu0 %v1008
        %1074 = vmatprep.subr.bf16.mxu0 %v1011
        %1075 = vmatpush1.bf16.msra.mxu0 %v1010
        %1076 = vmatprep.subr.bf16.mxu0 %v1013
        %1077 = vmatpush1.bf16.msra.mxu0 %v1012
        %1078 = vmatprep.subr.bf16.mxu0 %v1015
        %1079 = vmatpush1.bf16.msra.mxu0 %v1014
        %1080 = vmatprep.subr.bf16.mxu0 %v1017
        %1081 = vmatpush1.bf16.msra.mxu0 %v1016
        %1082 = vmatprep.subr.bf16.mxu0 %v1019
        %1083 = vmatpush1.bf16.msra.mxu0 %v1018
        %1084 = vmatprep.subr.bf16.mxu0 %v1021
        %1085 = vmatpush1.bf16.msra.mxu0 %v1020
        %1086 = vmatprep.subr.bf16.mxu0 %v1023
        %1087 = vmatpush1.bf16.msra.mxu0 %v1022
        %1088 = vmatprep.subr.bf16.mxu0 %v1025
        %1089 = vmatpush1.bf16.msra.mxu0 %v1024
        %1090 = vmatprep.subr.bf16.mxu0 %v1027
        %1091 = vmatpush1.bf16.msra.mxu0 %v1026
        %1092 = vmatprep.subr.bf16.mxu0 %v1029
        %1093 = vmatpush1.bf16.msra.mxu0 %v1028
        %1094 = vmatprep.subr.bf16.mxu0 %v1031
        %1095 = vmatpush1.bf16.msra.mxu0 %v1030
        %1096 = vmatprep.mubr.bf16.mxu0 %v829
        %1097 = vmatmul.mubr.bf16.gmra.mrb[0].mxu0 %v828
        %v1098 = vpop.f32.mrb[0].mxu0
        %v1099 = vadd.f32 %v897, %v1098
        %v1100 = vpop.f32.mrb[0].mxu0
        %v1101 = vadd.f32 %v901, %v1100
        %v1102 = vpop.f32.mrb[0].mxu0
        %v1103 = vadd.f32 %v897, %v1102
        %v1104 = vpop.f32.mrb[0].mxu0
        %v1105 = vadd.f32 %v901, %v1104
        %1106 = vmatprep.mubr.bf16.mxu0 %v831
        %1107 = vmatmul.mubr.bf16.gmra.mrb[0].mxu0 %v830
        %v1108 = vpop.f32.mrb[0].mxu0
        %v1109 = vadd.f32 %v897, %v1108
        %v1110 = vpop.f32.mrb[0].mxu0
        %v1111 = vadd.f32 %v901, %v1110
        %v1112 = vpop.f32.mrb[0].mxu0
        %v1113 = vadd.f32 %v897, %v1112
        %v1114 = vpop.f32.mrb[0].mxu0
        %v1115 = vadd.f32 %v901, %v1114
        %1116 = vmatprep.mubr.bf16.mxu0 %v833
        %1117 = vmatmul.mubr.bf16.gmra.mrb[0].mxu0 %v832
        %v1118 = vpop.f32.mrb[0].mxu0
        %v1119 = vadd.f32 %v897, %v1118
        %v1120 = vpop.f32.mrb[0].mxu0
        %v1121 = vadd.f32 %v901, %v1120
        %v1122 = vpop.f32.mrb[0].mxu0
        %v1123 = vadd.f32 %v897, %v1122
        %v1124 = vpop.f32.mrb[0].mxu0
        %v1125 = vadd.f32 %v901, %v1124
        %1126 = vmatprep.mubr.bf16.mxu0 %v835
        %1127 = vmatmul.mubr.bf16.gmra.mrb[0].mxu0 %v834
        %v1128 = vpop.f32.mrb[0].mxu0
        %v1129 = vadd.f32 %v897, %v1128
        %v1130 = vpop.f32.mrb[0].mxu0
        %v1131 = vadd.f32 %v901, %v1130
        %v1132 = vpop.f32.mrb[0].mxu0
        %v1133 = vadd.f32 %v897, %v1132
        %v1134 = vpop.f32.mrb[0].mxu0
        %v1135 = vadd.f32 %v901, %v1134
        %1136 = vmatprep.mubr.bf16.mxu0 %v837
        %1137 = vmatmul.mubr.bf16.gmra.mrb[0].mxu0 %v836
        %v1138 = vpop.f32.mrb[0].mxu0
        %v1139 = vadd.f32 %v897, %v1138
        %v1140 = vpop.f32.mrb[0].mxu0
        %v1141 = vadd.f32 %v901, %v1140
        %v1142 = vpop.f32.mrb[0].mxu0
        %v1143 = vadd.f32 %v897, %v1142
        %v1144 = vpop.f32.mrb[0].mxu0
        %v1145 = vadd.f32 %v901, %v1144
        %1146 = vmatprep.mubr.bf16.mxu0 %v839
        %1147 = vmatmul.mubr.bf16.gmra.mrb[0].mxu0 %v838
        %v1148 = vpop.f32.mrb[0].mxu0
        %v1149 = vadd.f32 %v897, %v1148
        %v1150 = vpop.f32.mrb[0].mxu0
        %v1151 = vadd.f32 %v901, %v1150
        %v1152 = vpop.f32.mrb[0].mxu0
        %v1153 = vadd.f32 %v897, %v1152
        %v1154 = vpop.f32.mrb[0].mxu0
        %v1155 = vadd.f32 %v901, %v1154
        %1156 = vmatprep.mubr.bf16.mxu0 %v841
        %1157 = vmatmul.mubr.bf16.gmra.mrb[0].mxu0 %v840
        %v1158 = vpop.f32.mrb[0].mxu0
        %v1159 = vadd.f32 %v897, %v1158
        %v1160 = vpop.f32.mrb[0].mxu0
        %v1161 = vadd.f32 %v901, %v1160
        %v1162 = vpop.f32.mrb[0].mxu0
        %v1163 = vadd.f32 %v897, %v1162
        %v1164 = vpop.f32.mrb[0].mxu0
        %v1165 = vadd.f32 %v901, %v1164
        %1166 = vmatprep.mubr.bf16.mxu0 %v843
        %1167 = vmatmul.mubr.bf16.gmra.mrb[0].mxu0 %v842
        %v1168 = vpop.f32.mrb[0].mxu0
        %v1169 = vadd.f32 %v897, %v1168
        %v1170 = vpop.f32.mrb[0].mxu0
        %v1171 = vadd.f32 %v901, %v1170
        %v1172 = vpop.f32.mrb[0].mxu0
        %v1173 = vadd.f32 %v897, %v1172
        %v1174 = vpop.f32.mrb[0].mxu0
        %v1175 = vadd.f32 %v901, %v1174
        %1176 = vmatprep.mubr.bf16.mxu0 %v845
        %1177 = vmatmul.mubr.bf16.gmra.mrb[0].mxu0 %v844
        %v1178 = vpop.f32.mrb[0].mxu0
        %v1179 = vadd.f32 %v897, %v1178
        %v1180 = vpop.f32.mrb[0].mxu0
        %v1181 = vadd.f32 %v901, %v1180
        %v1182 = vpop.f32.mrb[0].mxu0
        %v1183 = vadd.f32 %v897, %v1182
        %v1184 = vpop.f32.mrb[0].mxu0
        %v1185 = vadd.f32 %v901, %v1184
        %1186 = vmatprep.mubr.bf16.mxu0 %v847
        %1187 = vmatmul.mubr.bf16.gmra.mrb[0].mxu0 %v846
        %v1188 = vpop.f32.mrb[0].mxu0
        %v1189 = vadd.f32 %v897, %v1188
        %v1190 = vpop.f32.mrb[0].mxu0
        %v1191 = vadd.f32 %v901, %v1190
        %v1192 = vpop.f32.mrb[0].mxu0
        %v1193 = vadd.f32 %v897, %v1192
        %v1194 = vpop.f32.mrb[0].mxu0
        %v1195 = vadd.f32 %v901, %v1194
        %1196 = vmatprep.mubr.bf16.mxu0 %v849
        %1197 = vmatmul.mubr.bf16.gmra.mrb[0].mxu0 %v848
        %v1198 = vpop.f32.mrb[0].mxu0
        %v1199 = vadd.f32 %v897, %v1198
        %v1200 = vpop.f32.mrb[0].mxu0
        %v1201 = vadd.f32 %v901, %v1200
        %v1202 = vpop.f32.mrb[0].mxu0
        %v1203 = vadd.f32 %v897, %v1202
        %v1204 = vpop.f32.mrb[0].mxu0
        %v1205 = vadd.f32 %v901, %v1204
        %1206 = vmatprep.mubr.bf16.mxu0 %v851
        %1207 = vmatmul.mubr.bf16.gmra.mrb[0].mxu0 %v850
        %v1208 = vpop.f32.mrb[0].mxu0
        %v1209 = vadd.f32 %v897, %v1208
        %v1210 = vpop.f32.mrb[0].mxu0
        %v1211 = vadd.f32 %v901, %v1210
        %v1212 = vpop.f32.mrb[0].mxu0
        %v1213 = vadd.f32 %v897, %v1212
        %v1214 = vpop.f32.mrb[0].mxu0
        %v1215 = vadd.f32 %v901, %v1214
        %1216 = vmatprep.mubr.bf16.mxu0 %v853
        %1217 = vmatmul.mubr.bf16.gmra.mrb[0].mxu0 %v852
        %v1218 = vpop.f32.mrb[0].mxu0
        %v1219 = vadd.f32 %v897, %v1218
        %v1220 = vpop.f32.mrb[0].mxu0
        %v1221 = vadd.f32 %v901, %v1220
        %v1222 = vpop.f32.mrb[0].mxu0
        %v1223 = vadd.f32 %v897, %v1222
        %v1224 = vpop.f32.mrb[0].mxu0
        %v1225 = vadd.f32 %v901, %v1224
        %1226 = vmatprep.mubr.bf16.mxu0 %v855
        %1227 = vmatmul.mubr.bf16.gmra.mrb[0].mxu0 %v854
        %v1228 = vpop.f32.mrb[0].mxu0
        %v1229 = vadd.f32 %v897, %v1228
        %v1230 = vpop.f32.mrb[0].mxu0
        %v1231 = vadd.f32 %v901, %v1230
        %v1232 = vpop.f32.mrb[0].mxu0
        %v1233 = vadd.f32 %v897, %v1232
        %v1234 = vpop.f32.mrb[0].mxu0
        %v1235 = vadd.f32 %v901, %v1234
        %1236 = vmatprep.mubr.bf16.mxu0 %v857
        %1237 = vmatmul.mubr.bf16.gmra.mrb[0].mxu0 %v856
        %v1238 = vpop.f32.mrb[0].mxu0
        %v1239 = vadd.f32 %v897, %v1238
        %v1240 = vpop.f32.mrb[0].mxu0
        %v1241 = vadd.f32 %v901, %v1240
        %v1242 = vpop.f32.mrb[0].mxu0
        %v1243 = vadd.f32 %v897, %v1242
        %v1244 = vpop.f32.mrb[0].mxu0
        %v1245 = vadd.f32 %v901, %v1244
        %1246 = vmatprep.mubr.bf16.mxu0 %v859
        %1247 = vmatmul.mubr.bf16.gmra.mrb[0].mxu0 %v858
        %v1248 = vpop.f32.mrb[0].mxu0
        %v1249 = vadd.f32 %v897, %v1248
        %v1250 = vpop.f32.mrb[0].mxu0
        %v1251 = vadd.f32 %v901, %v1250
        %v1252 = vpop.f32.mrb[0].mxu0
        %v1253 = vadd.f32 %v897, %v1252
        %v1254 = vpop.f32.mrb[0].mxu0
        %v1255 = vadd.f32 %v901, %v1254
        %1256 = vdwg.mxu0
        %v1257 = vmax.f32 %v1099, 0.0
        %v1258 = vmax.f32 %v1101, 0.0
        %v1259 = vmax.f32 %v1103, 0.0
        %v1260 = vmax.f32 %v1105, 0.0
        %v1261 = vmax.f32 %v1109, 0.0
        %v1262 = vmax.f32 %v1111, 0.0
        %v1263 = vmax.f32 %v1113, 0.0
        %v1264 = vmax.f32 %v1115, 0.0
        %v1265 = vmax.f32 %v1119, 0.0
        %v1266 = vmax.f32 %v1121, 0.0
        %v1267 = vmax.f32 %v1123, 0.0
        %v1268 = vmax.f32 %v1125, 0.0
        %v1269 = vmax.f32 %v1129, 0.0
        %v1270 = vmax.f32 %v1131, 0.0
        %v1271 = vmax.f32 %v1133, 0.0
        %v1272 = vmax.f32 %v1135, 0.0
        %v1273 = vmax.f32 %v1139, 0.0
        %v1274 = vmax.f32 %v1141, 0.0
        %v1275 = vmax.f32 %v1143, 0.0
        %v1276 = vmax.f32 %v1145, 0.0
        %v1277 = vmax.f32 %v1149, 0.0
        %v1278 = vmax.f32 %v1151, 0.0
        %v1279 = vmax.f32 %v1153, 0.0
        %v1280 = vmax.f32 %v1155, 0.0
        %v1281 = vmax.f32 %v1159, 0.0
        %v1282 = vmax.f32 %v1161, 0.0
        %v1283 = vmax.f32 %v1163, 0.0
        %v1284 = vmax.f32 %v1165, 0.0
        %v1285 = vmax.f32 %v1169, 0.0
        %v1286 = vmax.f32 %v1171, 0.0
        %v1287 = vmax.f32 %v1173, 0.0
        %v1288 = vmax.f32 %v1175, 0.0
        %v1289 = vmax.f32 %v1179, 0.0
        %v1290 = vmax.f32 %v1181, 0.0
        %v1291 = vmax.f32 %v1183, 0.0
        %v1292 = vmax.f32 %v1185, 0.0
        %v1293 = vmax.f32 %v1189, 0.0
        %v1294 = vmax.f32 %v1191, 0.0
        %v1295 = vmax.f32 %v1193, 0.0
        %v1296 = vmax.f32 %v1195, 0.0
        %v1297 = vmax.f32 %v1199, 0.0
        %v1298 = vmax.f32 %v1201, 0.0
        %v1299 = vmax.f32 %v1203, 0.0
        %v1300 = vmax.f32 %v1205, 0.0
        %v1301 = vmax.f32 %v1209, 0.0
        %v1302 = vmax.f32 %v1211, 0.0
        %v1303 = vmax.f32 %v1213, 0.0
        %v1304 = vmax.f32 %v1215, 0.0
        %v1305 = vmax.f32 %v1219, 0.0
        %v1306 = vmax.f32 %v1221, 0.0
        %v1307 = vmax.f32 %v1223, 0.0
        %v1308 = vmax.f32 %v1225, 0.0
        %v1309 = vmax.f32 %v1229, 0.0
        %v1310 = vmax.f32 %v1231, 0.0
        %v1311 = vmax.f32 %v1233, 0.0
        %v1312 = vmax.f32 %v1235, 0.0
        %v1313 = vmax.f32 %v1239, 0.0
        %v1314 = vmax.f32 %v1241, 0.0
        %v1315 = vmax.f32 %v1243, 0.0
        %v1316 = vmax.f32 %v1245, 0.0
        %v1317 = vmax.f32 %v1249, 0.0
        %v1318 = vmax.f32 %v1251, 0.0
        %v1319 = vmax.f32 %v1253, 0.0
        %v1320 = vmax.f32 %v1255, 0.0
        %v1321 = vpack.c.bf16 %v1259, %v1257
        %v1322 = vpack.c.bf16 %v1260, %v1258
        %v1323 = vpack.c.bf16 %v1263, %v1261
        %v1324 = vpack.c.bf16 %v1264, %v1262
        %v1325 = vpack.c.bf16 %v1267, %v1265
        %v1326 = vpack.c.bf16 %v1268, %v1266
        %v1327 = vpack.c.bf16 %v1271, %v1269
        %v1328 = vpack.c.bf16 %v1272, %v1270
        %v1329 = vpack.c.bf16 %v1275, %v1273
        %v1330 = vpack.c.bf16 %v1276, %v1274
        %v1331 = vpack.c.bf16 %v1279, %v1277
        %v1332 = vpack.c.bf16 %v1280, %v1278
        %v1333 = vpack.c.bf16 %v1283, %v1281
        %v1334 = vpack.c.bf16 %v1284, %v1282
        %v1335 = vpack.c.bf16 %v1287, %v1285
        %v1336 = vpack.c.bf16 %v1288, %v1286
        %v1337 = vpack.c.bf16 %v1291, %v1289
        %v1338 = vpack.c.bf16 %v1292, %v1290
        %v1339 = vpack.c.bf16 %v1295, %v1293
        %v1340 = vpack.c.bf16 %v1296, %v1294
        %v1341 = vpack.c.bf16 %v1299, %v1297
        %v1342 = vpack.c.bf16 %v1300, %v1298
        %v1343 = vpack.c.bf16 %v1303, %v1301
        %v1344 = vpack.c.bf16 %v1304, %v1302
        %v1345 = vpack.c.bf16 %v1307, %v1305
        %v1346 = vpack.c.bf16 %v1308, %v1306
        %v1347 = vpack.c.bf16 %v1311, %v1309
        %v1348 = vpack.c.bf16 %v1312, %v1310
        %v1349 = vpack.c.bf16 %v1315, %v1313
        %v1350 = vpack.c.bf16 %v1316, %v1314
        %v1351 = vpack.c.bf16 %v1319, %v1317
        %v1352 = vpack.c.bf16 %v1320, %v1318
        %v1353 = vld [vmem:[#allocation2] sm:$0xff]
        %v1354 = vld [vmem:[#allocation2 + $0x8] sm:$0xff]
        %v1355 = vld [vmem:[#allocation2 + $0x10] sm:$0xff]
        %v1356 = vld [vmem:[#allocation2 + $0x18] sm:$0xff]
        %v1357 = vld [vmem:[#allocation2 + $0x20] sm:$0xff]
        %v1358 = vld [vmem:[#allocation2 + $0x28] sm:$0xff]
        %v1359 = vld [vmem:[#allocation2 + $0x30] sm:$0xff]
        %v1360 = vld [vmem:[#allocation2 + $0x38] sm:$0xff]
        %v1361 = vld [vmem:[#allocation2 + $0x40] sm:$0xff]
        %v1362 = vld [vmem:[#allocation2 + $0x48] sm:$0xff]
        %v1363 = vld [vmem:[#allocation2 + $0x50] sm:$0xff]
        %v1364 = vld [vmem:[#allocation2 + $0x58] sm:$0xff]
        %v1365 = vld [vmem:[#allocation2 + $0x60] sm:$0xff]
        %v1366 = vld [vmem:[#allocation2 + $0x68] sm:$0xff]
        %v1367 = vld [vmem:[#allocation2 + $0x70] sm:$0xff]
        %v1368 = vld [vmem:[#allocation2 + $0x78] sm:$0xff]
        %v1369 = vld [vmem:[#allocation2 + $0x80] sm:$0xff]
        %v1370 = vld [vmem:[#allocation2 + $0x88] sm:$0xff]
        %v1371 = vld [vmem:[#allocation2 + $0x90] sm:$0xff]
        %v1372 = vld [vmem:[#allocation2 + $0x98] sm:$0xff]
        %v1373 = vld [vmem:[#allocation2 + $0xa0] sm:$0xff]
        %v1374 = vld [vmem:[#allocation2 + $0xa8] sm:$0xff]
        %v1375 = vld [vmem:[#allocation2 + $0xb0] sm:$0xff]
        %v1376 = vld [vmem:[#allocation2 + $0xb8] sm:$0xff]
        %v1377 = vld [vmem:[#allocation2 + $0xc0] sm:$0xff]
        %v1378 = vld [vmem:[#allocation2 + $0xc8] sm:$0xff]
        %v1379 = vld [vmem:[#allocation2 + $0xd0] sm:$0xff]
        %v1380 = vld [vmem:[#allocation2 + $0xd8] sm:$0xff]
        %v1381 = vld [vmem:[#allocation2 + $0xe0] sm:$0xff]
        %v1382 = vld [vmem:[#allocation2 + $0xe8] sm:$0xff]
        %v1383 = vld [vmem:[#allocation2 + $0xf0] sm:$0xff]
        %v1384 = vld [vmem:[#allocation2 + $0xf8] sm:$0xff]
        %v1385 = vld [vmem:[%s6] sm:$0x3]
        %v1387 = vlaneseq
        %v1388 = vshrl.u32 %v1387, 7
        %v1389 = vsub.s32 0, %v1388
        %v1390 = vrot.slane %v1385, %v1389
        %v1391 = vlaneseq
        %v1392 = vshrl.u32 %v1391, 7
        %v1393 = vsub.s32 1, %v1392
        %v1394 = vrot.slane %v1385, %v1393
        %v1429 = vunpack.c.l.b16 %v1353
        %v1430 = vunpack.c.h.b16 %v1353
        %v1431 = vunpack.c.l.b16 %v1354
        %v1432 = vunpack.c.h.b16 %v1354
        %v1433 = vunpack.c.l.b16 %v1355
        %v1434 = vunpack.c.h.b16 %v1355
        %v1435 = vunpack.c.l.b16 %v1356
        %v1436 = vunpack.c.h.b16 %v1356
        %v1437 = vunpack.c.l.b16 %v1357
        %v1438 = vunpack.c.h.b16 %v1357
        %v1439 = vunpack.c.l.b16 %v1358
        %v1440 = vunpack.c.h.b16 %v1358
        %v1441 = vunpack.c.l.b16 %v1359
        %v1442 = vunpack.c.h.b16 %v1359
        %v1443 = vunpack.c.l.b16 %v1360
        %v1444 = vunpack.c.h.b16 %v1360
        %v1445 = vunpack.c.l.b16 %v1361
        %v1446 = vunpack.c.h.b16 %v1361
        %v1447 = vunpack.c.l.b16 %v1362
        %v1448 = vunpack.c.h.b16 %v1362
        %v1449 = vunpack.c.l.b16 %v1363
        %v1450 = vunpack.c.h.b16 %v1363
        %v1451 = vunpack.c.l.b16 %v1364
        %v1452 = vunpack.c.h.b16 %v1364
        %v1453 = vunpack.c.l.b16 %v1365
        %v1454 = vunpack.c.h.b16 %v1365
        %v1455 = vunpack.c.l.b16 %v1366
        %v1456 = vunpack.c.h.b16 %v1366
        %v1457 = vunpack.c.l.b16 %v1367
        %v1458 = vunpack.c.h.b16 %v1367
        %v1459 = vunpack.c.l.b16 %v1368
        %v1460 = vunpack.c.h.b16 %v1368
        %v1461 = vunpack.c.l.b16 %v1369
        %v1462 = vunpack.c.h.b16 %v1369
        %v1463 = vunpack.c.l.b16 %v1370
        %v1464 = vunpack.c.h.b16 %v1370
        %v1465 = vunpack.c.l.b16 %v1371
        %v1466 = vunpack.c.h.b16 %v1371
        %v1467 = vunpack.c.l.b16 %v1372
        %v1468 = vunpack.c.h.b16 %v1372
        %v1469 = vunpack.c.l.b16 %v1373
        %v1470 = vunpack.c.h.b16 %v1373
        %v1471 = vunpack.c.l.b16 %v1374
        %v1472 = vunpack.c.h.b16 %v1374
        %v1473 = vunpack.c.l.b16 %v1375
        %v1474 = vunpack.c.h.b16 %v1375
        %v1475 = vunpack.c.l.b16 %v1376
        %v1476 = vunpack.c.h.b16 %v1376
        %v1477 = vunpack.c.l.b16 %v1377
        %v1478 = vunpack.c.h.b16 %v1377
        %v1479 = vunpack.c.l.b16 %v1378
        %v1480 = vunpack.c.h.b16 %v1378
        %v1481 = vunpack.c.l.b16 %v1379
        %v1482 = vunpack.c.h.b16 %v1379
        %v1483 = vunpack.c.l.b16 %v1380
        %v1484 = vunpack.c.h.b16 %v1380
        %v1485 = vunpack.c.l.b16 %v1381
        %v1486 = vunpack.c.h.b16 %v1381
        %v1487 = vunpack.c.l.b16 %v1382
        %v1488 = vunpack.c.h.b16 %v1382
        %v1489 = vunpack.c.l.b16 %v1383
        %v1490 = vunpack.c.h.b16 %v1383
        %v1491 = vunpack.c.l.b16 %v1384
        %v1492 = vunpack.c.h.b16 %v1384
        %v1493 = vpack.c.b16 %v1431, %v1429
        %v1494 = vpack.c.b16 %v1432, %v1430
        %v1495 = vpack.c.b16 %v1435, %v1433
        %v1496 = vpack.c.b16 %v1436, %v1434
        %v1497 = vpack.c.b16 %v1439, %v1437
        %v1498 = vpack.c.b16 %v1440, %v1438
        %v1499 = vpack.c.b16 %v1443, %v1441
        %v1500 = vpack.c.b16 %v1444, %v1442
        %v1501 = vpack.c.b16 %v1447, %v1445
        %v1502 = vpack.c.b16 %v1448, %v1446
        %v1503 = vpack.c.b16 %v1451, %v1449
        %v1504 = vpack.c.b16 %v1452, %v1450
        %v1505 = vpack.c.b16 %v1455, %v1453
        %v1506 = vpack.c.b16 %v1456, %v1454
        %v1507 = vpack.c.b16 %v1459, %v1457
        %v1508 = vpack.c.b16 %v1460, %v1458
        %v1509 = vpack.c.b16 %v1463, %v1461
        %v1510 = vpack.c.b16 %v1464, %v1462
        %v1511 = vpack.c.b16 %v1467, %v1465
        %v1512 = vpack.c.b16 %v1468, %v1466
        %v1513 = vpack.c.b16 %v1471, %v1469
        %v1514 = vpack.c.b16 %v1472, %v1470
        %v1515 = vpack.c.b16 %v1475, %v1473
        %v1516 = vpack.c.b16 %v1476, %v1474
        %v1517 = vpack.c.b16 %v1479, %v1477
        %v1518 = vpack.c.b16 %v1480, %v1478
        %v1519 = vpack.c.b16 %v1483, %v1481
        %v1520 = vpack.c.b16 %v1484, %v1482
        %v1521 = vpack.c.b16 %v1487, %v1485
        %v1522 = vpack.c.b16 %v1488, %v1486
        %v1523 = vpack.c.b16 %v1491, %v1489
        %v1524 = vpack.c.b16 %v1492, %v1490
        %1557 = vmatprep.subr.bf16.mxu0 %v1494
        %1558 = vmatpush1.bf16.msra.mxu0 %v1493
        %1559 = vmatprep.subr.bf16.mxu0 %v1496
        %1560 = vmatpush1.bf16.msra.mxu0 %v1495
        %1561 = vmatprep.subr.bf16.mxu0 %v1498
        %1562 = vmatpush1.bf16.msra.mxu0 %v1497
        %1563 = vmatprep.subr.bf16.mxu0 %v1500
        %1564 = vmatpush1.bf16.msra.mxu0 %v1499
        %1565 = vmatprep.subr.bf16.mxu0 %v1502
        %1566 = vmatpush1.bf16.msra.mxu0 %v1501
        %1567 = vmatprep.subr.bf16.mxu0 %v1504
        %1568 = vmatpush1.bf16.msra.mxu0 %v1503
        %1569 = vmatprep.subr.bf16.mxu0 %v1506
        %1570 = vmatpush1.bf16.msra.mxu0 %v1505
        %1571 = vmatprep.subr.bf16.mxu0 %v1508
        %1572 = vmatpush1.bf16.msra.mxu0 %v1507
        %1573 = vmatprep.subr.bf16.mxu0 %v1510
        %1574 = vmatpush1.bf16.msra.mxu0 %v1509
        %1575 = vmatprep.subr.bf16.mxu0 %v1512
        %1576 = vmatpush1.bf16.msra.mxu0 %v1511
        %1577 = vmatprep.subr.bf16.mxu0 %v1514
        %1578 = vmatpush1.bf16.msra.mxu0 %v1513
        %1579 = vmatprep.subr.bf16.mxu0 %v1516
        %1580 = vmatpush1.bf16.msra.mxu0 %v1515
        %1581 = vmatprep.subr.bf16.mxu0 %v1518
        %1582 = vmatpush1.bf16.msra.mxu0 %v1517
        %1583 = vmatprep.subr.bf16.mxu0 %v1520
        %1584 = vmatpush1.bf16.msra.mxu0 %v1519
        %1585 = vmatprep.subr.bf16.mxu0 %v1522
        %1586 = vmatpush1.bf16.msra.mxu0 %v1521
        %1587 = vmatprep.subr.bf16.mxu0 %v1524
        %1588 = vmatpush1.bf16.msra.mxu0 %v1523
        %1589 = vmatprep.mubr.bf16.mxu0 %v1322
        %1590 = vmatmul.mubr.bf16.gmra.mrb[0].mxu0 %v1321
        %v1591 = vpop.f32.mrb[0].mxu0
        %v1592 = vadd.f32 %v1390, %v1591
        %v1593 = vpop.f32.mrb[0].mxu0
        %v1594 = vadd.f32 %v1394, %v1593
        %v1595 = vpop.f32.mrb[0].mxu0
        %v1596 = vadd.f32 %v1390, %v1595
        %v1597 = vpop.f32.mrb[0].mxu0
        %v1598 = vadd.f32 %v1394, %v1597
        %1599 = vmatprep.mubr.bf16.mxu0 %v1324
        %1600 = vmatmul.mubr.bf16.gmra.mrb[0].mxu0 %v1323
        %v1601 = vpop.f32.mrb[0].mxu0
        %v1602 = vadd.f32 %v1390, %v1601
        %v1603 = vpop.f32.mrb[0].mxu0
        %v1604 = vadd.f32 %v1394, %v1603
        %v1605 = vpop.f32.mrb[0].mxu0
        %v1606 = vadd.f32 %v1390, %v1605
        %v1607 = vpop.f32.mrb[0].mxu0
        %v1608 = vadd.f32 %v1394, %v1607
        %1609 = vmatprep.mubr.bf16.mxu0 %v1326
        %1610 = vmatmul.mubr.bf16.gmra.mrb[0].mxu0 %v1325
        %v1611 = vpop.f32.mrb[0].mxu0
        %v1612 = vadd.f32 %v1390, %v1611
        %v1613 = vpop.f32.mrb[0].mxu0
        %v1614 = vadd.f32 %v1394, %v1613
        %v1615 = vpop.f32.mrb[0].mxu0
        %v1616 = vadd.f32 %v1390, %v1615
        %v1617 = vpop.f32.mrb[0].mxu0
        %v1618 = vadd.f32 %v1394, %v1617
        %1619 = vmatprep.mubr.bf16.mxu0 %v1328
        %1620 = vmatmul.mubr.bf16.gmra.mrb[0].mxu0 %v1327
        %v1621 = vpop.f32.mrb[0].mxu0
        %v1622 = vadd.f32 %v1390, %v1621
        %v1623 = vpop.f32.mrb[0].mxu0
        %v1624 = vadd.f32 %v1394, %v1623
        %v1625 = vpop.f32.mrb[0].mxu0
        %v1626 = vadd.f32 %v1390, %v1625
        %v1627 = vpop.f32.mrb[0].mxu0
        %v1628 = vadd.f32 %v1394, %v1627
        %1629 = vmatprep.mubr.bf16.mxu0 %v1330
        %1630 = vmatmul.mubr.bf16.gmra.mrb[0].mxu0 %v1329
        %v1631 = vpop.f32.mrb[0].mxu0
        %v1632 = vadd.f32 %v1390, %v1631
        %v1633 = vpop.f32.mrb[0].mxu0
        %v1634 = vadd.f32 %v1394, %v1633
        %v1635 = vpop.f32.mrb[0].mxu0
        %v1636 = vadd.f32 %v1390, %v1635
        %v1637 = vpop.f32.mrb[0].mxu0
        %v1638 = vadd.f32 %v1394, %v1637
        %1639 = vmatprep.mubr.bf16.mxu0 %v1332
        %1640 = vmatmul.mubr.bf16.gmra.mrb[0].mxu0 %v1331
        %v1641 = vpop.f32.mrb[0].mxu0
        %v1642 = vadd.f32 %v1390, %v1641
        %v1643 = vpop.f32.mrb[0].mxu0
        %v1644 = vadd.f32 %v1394, %v1643
        %v1645 = vpop.f32.mrb[0].mxu0
        %v1646 = vadd.f32 %v1390, %v1645
        %v1647 = vpop.f32.mrb[0].mxu0
        %v1648 = vadd.f32 %v1394, %v1647
        %1649 = vmatprep.mubr.bf16.mxu0 %v1334
        %1650 = vmatmul.mubr.bf16.gmra.mrb[0].mxu0 %v1333
        %v1651 = vpop.f32.mrb[0].mxu0
        %v1652 = vadd.f32 %v1390, %v1651
        %v1653 = vpop.f32.mrb[0].mxu0
        %v1654 = vadd.f32 %v1394, %v1653
        %v1655 = vpop.f32.mrb[0].mxu0
        %v1656 = vadd.f32 %v1390, %v1655
        %v1657 = vpop.f32.mrb[0].mxu0
        %v1658 = vadd.f32 %v1394, %v1657
        %1659 = vmatprep.mubr.bf16.mxu0 %v1336
        %1660 = vmatmul.mubr.bf16.gmra.mrb[0].mxu0 %v1335
        %v1661 = vpop.f32.mrb[0].mxu0
        %v1662 = vadd.f32 %v1390, %v1661
        %v1663 = vpop.f32.mrb[0].mxu0
        %v1664 = vadd.f32 %v1394, %v1663
        %v1665 = vpop.f32.mrb[0].mxu0
        %v1666 = vadd.f32 %v1390, %v1665
        %v1667 = vpop.f32.mrb[0].mxu0
        %v1668 = vadd.f32 %v1394, %v1667
        %1669 = vmatprep.mubr.bf16.mxu0 %v1338
        %1670 = vmatmul.mubr.bf16.gmra.mrb[0].mxu0 %v1337
        %v1671 = vpop.f32.mrb[0].mxu0
        %v1672 = vadd.f32 %v1390, %v1671
        %v1673 = vpop.f32.mrb[0].mxu0
        %v1674 = vadd.f32 %v1394, %v1673
        %v1675 = vpop.f32.mrb[0].mxu0
        %v1676 = vadd.f32 %v1390, %v1675
        %v1677 = vpop.f32.mrb[0].mxu0
        %v1678 = vadd.f32 %v1394, %v1677
        %1679 = vmatprep.mubr.bf16.mxu0 %v1340
        %1680 = vmatmul.mubr.bf16.gmra.mrb[0].mxu0 %v1339
        %v1681 = vpop.f32.mrb[0].mxu0
        %v1682 = vadd.f32 %v1390, %v1681
        %v1683 = vpop.f32.mrb[0].mxu0
        %v1684 = vadd.f32 %v1394, %v1683
        %v1685 = vpop.f32.mrb[0].mxu0
        %v1686 = vadd.f32 %v1390, %v1685
        %v1687 = vpop.f32.mrb[0].mxu0
        %v1688 = vadd.f32 %v1394, %v1687
        %1689 = vmatprep.mubr.bf16.mxu0 %v1342
        %1690 = vmatmul.mubr.bf16.gmra.mrb[0].mxu0 %v1341
        %v1691 = vpop.f32.mrb[0].mxu0
        %v1692 = vadd.f32 %v1390, %v1691
        %v1693 = vpop.f32.mrb[0].mxu0
        %v1694 = vadd.f32 %v1394, %v1693
        %v1695 = vpop.f32.mrb[0].mxu0
        %v1696 = vadd.f32 %v1390, %v1695
        %v1697 = vpop.f32.mrb[0].mxu0
        %v1698 = vadd.f32 %v1394, %v1697
        %1699 = vmatprep.mubr.bf16.mxu0 %v1344
        %1700 = vmatmul.mubr.bf16.gmra.mrb[0].mxu0 %v1343
        %v1701 = vpop.f32.mrb[0].mxu0
        %v1702 = vadd.f32 %v1390, %v1701
        %v1703 = vpop.f32.mrb[0].mxu0
        %v1704 = vadd.f32 %v1394, %v1703
        %v1705 = vpop.f32.mrb[0].mxu0
        %v1706 = vadd.f32 %v1390, %v1705
        %v1707 = vpop.f32.mrb[0].mxu0
        %v1708 = vadd.f32 %v1394, %v1707
        %1709 = vmatprep.mubr.bf16.mxu0 %v1346
        %1710 = vmatmul.mubr.bf16.gmra.mrb[0].mxu0 %v1345
        %v1711 = vpop.f32.mrb[0].mxu0
        %v1712 = vadd.f32 %v1390, %v1711
        %v1713 = vpop.f32.mrb[0].mxu0
        %v1714 = vadd.f32 %v1394, %v1713
        %v1715 = vpop.f32.mrb[0].mxu0
        %v1716 = vadd.f32 %v1390, %v1715
        %v1717 = vpop.f32.mrb[0].mxu0
        %v1718 = vadd.f32 %v1394, %v1717
        %1719 = vmatprep.mubr.bf16.mxu0 %v1348
        %1720 = vmatmul.mubr.bf16.gmra.mrb[0].mxu0 %v1347
        %v1721 = vpop.f32.mrb[0].mxu0
        %v1722 = vadd.f32 %v1390, %v1721
        %v1723 = vpop.f32.mrb[0].mxu0
        %v1724 = vadd.f32 %v1394, %v1723
        %v1725 = vpop.f32.mrb[0].mxu0
        %v1726 = vadd.f32 %v1390, %v1725
        %v1727 = vpop.f32.mrb[0].mxu0
        %v1728 = vadd.f32 %v1394, %v1727
        %1729 = vmatprep.mubr.bf16.mxu0 %v1350
        %1730 = vmatmul.mubr.bf16.gmra.mrb[0].mxu0 %v1349
        %v1731 = vpop.f32.mrb[0].mxu0
        %v1732 = vadd.f32 %v1390, %v1731
        %v1733 = vpop.f32.mrb[0].mxu0
        %v1734 = vadd.f32 %v1394, %v1733
        %v1735 = vpop.f32.mrb[0].mxu0
        %v1736 = vadd.f32 %v1390, %v1735
        %v1737 = vpop.f32.mrb[0].mxu0
        %v1738 = vadd.f32 %v1394, %v1737
        %1739 = vmatprep.mubr.bf16.mxu0 %v1352
        %1740 = vmatmul.mubr.bf16.gmra.mrb[0].mxu0 %v1351
        %v1741 = vpop.f32.mrb[0].mxu0
        %v1742 = vadd.f32 %v1390, %v1741
        %v1743 = vpop.f32.mrb[0].mxu0
        %v1744 = vadd.f32 %v1394, %v1743
        %v1745 = vpop.f32.mrb[0].mxu0
        %v1746 = vadd.f32 %v1390, %v1745
        %v1747 = vpop.f32.mrb[0].mxu0
        %v1748 = vadd.f32 %v1394, %v1747
        %1749 = vdwg.mxu0
        %v1750 = vmax.f32 %v1592, 0.0
        %v1751 = vmax.f32 %v1594, 0.0
        %v1752 = vmax.f32 %v1596, 0.0
        %v1753 = vmax.f32 %v1598, 0.0
        %v1754 = vmax.f32 %v1602, 0.0
        %v1755 = vmax.f32 %v1604, 0.0
        %v1756 = vmax.f32 %v1606, 0.0
        %v1757 = vmax.f32 %v1608, 0.0
        %v1758 = vmax.f32 %v1612, 0.0
        %v1759 = vmax.f32 %v1614, 0.0
        %v1760 = vmax.f32 %v1616, 0.0
        %v1761 = vmax.f32 %v1618, 0.0
        %v1762 = vmax.f32 %v1622, 0.0
        %v1763 = vmax.f32 %v1624, 0.0
        %v1764 = vmax.f32 %v1626, 0.0
        %v1765 = vmax.f32 %v1628, 0.0
        %v1766 = vmax.f32 %v1632, 0.0
        %v1767 = vmax.f32 %v1634, 0.0
        %v1768 = vmax.f32 %v1636, 0.0
        %v1769 = vmax.f32 %v1638, 0.0
        %v1770 = vmax.f32 %v1642, 0.0
        %v1771 = vmax.f32 %v1644, 0.0
        %v1772 = vmax.f32 %v1646, 0.0
        %v1773 = vmax.f32 %v1648, 0.0
        %v1774 = vmax.f32 %v1652, 0.0
        %v1775 = vmax.f32 %v1654, 0.0
        %v1776 = vmax.f32 %v1656, 0.0
        %v1777 = vmax.f32 %v1658, 0.0
        %v1778 = vmax.f32 %v1662, 0.0
        %v1779 = vmax.f32 %v1664, 0.0
        %v1780 = vmax.f32 %v1666, 0.0
        %v1781 = vmax.f32 %v1668, 0.0
        %v1782 = vmax.f32 %v1672, 0.0
        %v1783 = vmax.f32 %v1674, 0.0
        %v1784 = vmax.f32 %v1676, 0.0
        %v1785 = vmax.f32 %v1678, 0.0
        %v1786 = vmax.f32 %v1682, 0.0
        %v1787 = vmax.f32 %v1684, 0.0
        %v1788 = vmax.f32 %v1686, 0.0
        %v1789 = vmax.f32 %v1688, 0.0
        %v1790 = vmax.f32 %v1692, 0.0
        %v1791 = vmax.f32 %v1694, 0.0
        %v1792 = vmax.f32 %v1696, 0.0
        %v1793 = vmax.f32 %v1698, 0.0
        %v1794 = vmax.f32 %v1702, 0.0
        %v1795 = vmax.f32 %v1704, 0.0
        %v1796 = vmax.f32 %v1706, 0.0
        %v1797 = vmax.f32 %v1708, 0.0
        %v1798 = vmax.f32 %v1712, 0.0
        %v1799 = vmax.f32 %v1714, 0.0
        %v1800 = vmax.f32 %v1716, 0.0
        %v1801 = vmax.f32 %v1718, 0.0
        %v1802 = vmax.f32 %v1722, 0.0
        %v1803 = vmax.f32 %v1724, 0.0
        %v1804 = vmax.f32 %v1726, 0.0
        %v1805 = vmax.f32 %v1728, 0.0
        %v1806 = vmax.f32 %v1732, 0.0
        %v1807 = vmax.f32 %v1734, 0.0
        %v1808 = vmax.f32 %v1736, 0.0
        %v1809 = vmax.f32 %v1738, 0.0
        %v1810 = vmax.f32 %v1742, 0.0
        %v1811 = vmax.f32 %v1744, 0.0
        %v1812 = vmax.f32 %v1746, 0.0
        %v1813 = vmax.f32 %v1748, 0.0
        %v1814 = vadd.f32 %v1750, %v1752
        %v1815 = vadd.f32 %v1814, %v1754
        %v1816 = vadd.f32 %v1815, %v1756
        %v1817 = vadd.f32 %v1816, %v1758
        %v1818 = vadd.f32 %v1817, %v1760
        %v1819 = vadd.f32 %v1818, %v1762
        %v1820 = vadd.f32 %v1819, %v1764
        %v1821 = vadd.f32 %v1820, %v1766
        %v1822 = vadd.f32 %v1821, %v1768
        %v1823 = vadd.f32 %v1822, %v1770
        %v1824 = vadd.f32 %v1823, %v1772
        %v1825 = vadd.f32 %v1824, %v1774
        %v1826 = vadd.f32 %v1825, %v1776
        %v1827 = vadd.f32 %v1826, %v1778
        %v1828 = vadd.f32 %v1827, %v1780
        %v1829 = vadd.f32 %v1828, %v1782
        %v1830 = vadd.f32 %v1829, %v1784
        %v1831 = vadd.f32 %v1830, %v1786
        %v1832 = vadd.f32 %v1831, %v1788
        %v1833 = vadd.f32 %v1832, %v1790
        %v1834 = vadd.f32 %v1833, %v1792
        %v1835 = vadd.f32 %v1834, %v1794
        %v1836 = vadd.f32 %v1835, %v1796
        %v1837 = vadd.f32 %v1836, %v1798
        %v1838 = vadd.f32 %v1837, %v1800
        %v1839 = vadd.f32 %v1838, %v1802
        %v1840 = vadd.f32 %v1839, %v1804
        %v1841 = vadd.f32 %v1840, %v1806
        %v1842 = vadd.f32 %v1841, %v1808
        %v1843 = vadd.f32 %v1842, %v1810
        %v1844 = vadd.f32 %v1843, %v1812
        %v1845 = vrot.slane %v1844, 4
        %v1846 = vadd.f32 %v1844, %v1845
        %v1847 = vrot.slane %v1846, 2
        %v1848 = vadd.f32 %v1846, %v1847
        %v1849 = vrot.slane %v1848, 1
        %v1850 = vadd.f32 %v1848, %v1849
        %v1851 = vadd.f32 %v1751, %v1753
        %v1852 = vadd.f32 %v1851, %v1755
        %v1853 = vadd.f32 %v1852, %v1757
        %v1854 = vadd.f32 %v1853, %v1759
        %v1855 = vadd.f32 %v1854, %v1761
        %v1856 = vadd.f32 %v1855, %v1763
        %v1857 = vadd.f32 %v1856, %v1765
        %v1858 = vadd.f32 %v1857, %v1767
        %v1859 = vadd.f32 %v1858, %v1769
        %v1860 = vadd.f32 %v1859, %v1771
        %v1861 = vadd.f32 %v1860, %v1773
        %v1862 = vadd.f32 %v1861, %v1775
        %v1863 = vadd.f32 %v1862, %v1777
        %v1864 = vadd.f32 %v1863, %v1779
        %v1865 = vadd.f32 %v1864, %v1781
        %v1866 = vadd.f32 %v1865, %v1783
        %v1867 = vadd.f32 %v1866, %v1785
        %v1868 = vadd.f32 %v1867, %v1787
        %v1869 = vadd.f32 %v1868, %v1789
        %v1870 = vadd.f32 %v1869, %v1791
        %v1871 = vadd.f32 %v1870, %v1793
        %v1872 = vadd.f32 %v1871, %v1795
        %v1873 = vadd.f32 %v1872, %v1797
        %v1874 = vadd.f32 %v1873, %v1799
        %v1875 = vadd.f32 %v1874, %v1801
        %v1876 = vadd.f32 %v1875, %v1803
        %v1877 = vadd.f32 %v1876, %v1805
        %v1878 = vadd.f32 %v1877, %v1807
        %v1879 = vadd.f32 %v1878, %v1809
        %v1880 = vadd.f32 %v1879, %v1811
        %v1881 = vadd.f32 %v1880, %v1813
        %v1882 = vrot.slane %v1881, 4
        %v1883 = vadd.f32 %v1881, %v1882
        %v1884 = vrot.slane %v1883, 2
        %v1885 = vadd.f32 %v1883, %v1884
        %v1886 = vrot.slane %v1885, 1
        %v1887 = vadd.f32 %v1885, %v1886
        %v1888 = vpack.c.bf16 %v1850, %v1850
        %v1889 = vpack.c.bf16 %v1887, %v1887
        %v1890 = vld [vmem:[#allocation5] sm:$0xf]
        %v1891 = vld [vmem:[#allocation5 + $0x4] sm:$0xf]
        %v1892 = vld [vmem:[#allocation5 + $0x8] sm:$0xf]
        %v1893 = vld [vmem:[#allocation5 + $0xc] sm:$0xf]
        %v1894 = vld [vmem:[#allocation5 + $0x10] sm:$0xf]
        %v1895 = vld [vmem:[#allocation5 + $0x14] sm:$0xf]
        %v1896 = vld [vmem:[#allocation5 + $0x18] sm:$0xf]
        %v1897 = vld [vmem:[#allocation5 + $0x1c] sm:$0xf]
        %v1898 = vld [vmem:[#allocation5 + $0x20] sm:$0xf]
        %v1899 = vld [vmem:[#allocation5 + $0x24] sm:$0xf]
        %v1900 = vld [vmem:[#allocation5 + $0x28] sm:$0xf]
        %v1901 = vld [vmem:[#allocation5 + $0x2c] sm:$0xf]
        %v1902 = vld [vmem:[#allocation5 + $0x30] sm:$0xf]
        %v1903 = vld [vmem:[#allocation5 + $0x34] sm:$0xf]
        %v1904 = vld [vmem:[#allocation5 + $0x38] sm:$0xf]
        %v1905 = vld [vmem:[#allocation5 + $0x3c] sm:$0xf]
        %v1906 = vld [vmem:[#allocation5 + $0x40] sm:$0xf]
        %v1907 = vld [vmem:[#allocation5 + $0x44] sm:$0xf]
        %v1908 = vld [vmem:[#allocation5 + $0x48] sm:$0xf]
        %v1909 = vld [vmem:[#allocation5 + $0x4c] sm:$0xf]
        %v1910 = vld [vmem:[#allocation5 + $0x50] sm:$0xf]
        %v1911 = vld [vmem:[#allocation5 + $0x54] sm:$0xf]
        %v1912 = vld [vmem:[#allocation5 + $0x58] sm:$0xf]
        %v1913 = vld [vmem:[#allocation5 + $0x5c] sm:$0xf]
        %v1914 = vld [vmem:[#allocation5 + $0x60] sm:$0xf]
        %v1915 = vld [vmem:[#allocation5 + $0x64] sm:$0xf]
        %v1916 = vld [vmem:[#allocation5 + $0x68] sm:$0xf]
        %v1917 = vld [vmem:[#allocation5 + $0x6c] sm:$0xf]
        %v1918 = vld [vmem:[#allocation5 + $0x70] sm:$0xf]
        %v1919 = vld [vmem:[#allocation5 + $0x74] sm:$0xf]
        %v1920 = vld [vmem:[#allocation5 + $0x78] sm:$0xf]
        %v1921 = vld [vmem:[#allocation5 + $0x7c] sm:$0xf]
        %v1922 = vld [vmem:[%s8] sm:$0x1]
        %v1955 = vunpack.c.l.b16 %v1890
        %v1956 = vunpack.c.l.b16 %v1891
        %v1957 = vunpack.c.l.b16 %v1892
        %v1958 = vunpack.c.l.b16 %v1893
        %v1959 = vunpack.c.l.b16 %v1894
        %v1960 = vunpack.c.l.b16 %v1895
        %v1961 = vunpack.c.l.b16 %v1896
        %v1962 = vunpack.c.l.b16 %v1897
        %v1963 = vunpack.c.l.b16 %v1898
        %v1964 = vunpack.c.l.b16 %v1899
        %v1965 = vunpack.c.l.b16 %v1900
        %v1966 = vunpack.c.l.b16 %v1901
        %v1967 = vunpack.c.l.b16 %v1902
        %v1968 = vunpack.c.l.b16 %v1903
        %v1969 = vunpack.c.l.b16 %v1904
        %v1970 = vunpack.c.l.b16 %v1905
        %v1971 = vunpack.c.l.b16 %v1906
        %v1972 = vunpack.c.l.b16 %v1907
        %v1973 = vunpack.c.l.b16 %v1908
        %v1974 = vunpack.c.l.b16 %v1909
        %v1975 = vunpack.c.l.b16 %v1910
        %v1976 = vunpack.c.l.b16 %v1911
        %v1977 = vunpack.c.l.b16 %v1912
        %v1978 = vunpack.c.l.b16 %v1913
        %v1979 = vunpack.c.l.b16 %v1914
        %v1980 = vunpack.c.l.b16 %v1915
        %v1981 = vunpack.c.l.b16 %v1916
        %v1982 = vunpack.c.l.b16 %v1917
        %v1983 = vunpack.c.l.b16 %v1918
        %v1984 = vunpack.c.l.b16 %v1919
        %v1985 = vunpack.c.l.b16 %v1920
        %v1986 = vunpack.c.l.b16 %v1921
        %v1987 = vpack.c.b16 %v1956, %v1955
        %v1988 = vpack.c.b16 %v1958, %v1957
        %v1989 = vpack.c.b16 %v1960, %v1959
        %v1990 = vpack.c.b16 %v1962, %v1961
        %v1991 = vpack.c.b16 %v1964, %v1963
        %v1992 = vpack.c.b16 %v1966, %v1965
        %v1993 = vpack.c.b16 %v1968, %v1967
        %v1994 = vpack.c.b16 %v1970, %v1969
        %v1995 = vpack.c.b16 %v1972, %v1971
        %v1996 = vpack.c.b16 %v1974, %v1973
        %v1997 = vpack.c.b16 %v1976, %v1975
        %v1998 = vpack.c.b16 %v1978, %v1977
        %v1999 = vpack.c.b16 %v1980, %v1979
        %v2000 = vpack.c.b16 %v1982, %v1981
        %v2001 = vpack.c.b16 %v1984, %v1983
        %v2002 = vpack.c.b16 %v1986, %v1985
        %2019 = vmatprep.subr.bf16.mxu0 0
        %2020 = vmatpush1.bf16.msra.mxu0 %v1987
        %2021 = vmatprep.subr.bf16.mxu0 0
        %2022 = vmatpush1.bf16.msra.mxu0 %v1988
        %2023 = vmatprep.subr.bf16.mxu0 0
        %2024 = vmatpush1.bf16.msra.mxu0 %v1989
        %2025 = vmatprep.subr.bf16.mxu0 0
        %2026 = vmatpush1.bf16.msra.mxu0 %v1990
        %2027 = vmatprep.subr.bf16.mxu0 0
        %2028 = vmatpush1.bf16.msra.mxu0 %v1991
        %2029 = vmatprep.subr.bf16.mxu0 0
        %2030 = vmatpush1.bf16.msra.mxu0 %v1992
        %2031 = vmatprep.subr.bf16.mxu0 0
        %2032 = vmatpush1.bf16.msra.mxu0 %v1993
        %2033 = vmatprep.subr.bf16.mxu0 0
        %2034 = vmatpush1.bf16.msra.mxu0 %v1994
        %2035 = vmatprep.subr.bf16.mxu0 0
        %2036 = vmatpush1.bf16.msra.mxu0 %v1995
        %2037 = vmatprep.subr.bf16.mxu0 0
        %2038 = vmatpush1.bf16.msra.mxu0 %v1996
        %2039 = vmatprep.subr.bf16.mxu0 0
        %2040 = vmatpush1.bf16.msra.mxu0 %v1997
        %2041 = vmatprep.subr.bf16.mxu0 0
        %2042 = vmatpush1.bf16.msra.mxu0 %v1998
        %2043 = vmatprep.subr.bf16.mxu0 0
        %2044 = vmatpush1.bf16.msra.mxu0 %v1999
        %2045 = vmatprep.subr.bf16.mxu0 0
        %2046 = vmatpush1.bf16.msra.mxu0 %v2000
        %2047 = vmatprep.subr.bf16.mxu0 0
        %2048 = vmatpush1.bf16.msra.mxu0 %v2001
        %2049 = vmatprep.subr.bf16.mxu0 0
        %2050 = vmatpush1.bf16.msra.mxu0 %v2002
        %2051 = vmatprep.mubr.bf16.mxu0 %v1889
        %2052 = vmatmul.mubr.bf16.gmra.mrb[0].mxu0 %v1888
        %v2053 = vpop.f32.mrb[0].mxu0
        %v2054 = vadd.f32 %v1922, %v2053
        %v2055 = vpop.f32.mrb[0].mxu0
        %v2056 = vpop.f32.mrb[0].mxu0
        %v2057 = vpop.f32.mrb[0].mxu0
        %2058 = vdwg.mxu0
        %2059 = vst [vmem:[%s354] sm:$0x1] %v2054
        %s2060 = sand.u32 %s227, 1
        %s2061 = scalar_lea.sflag [#allocation4], %s2060
        %s2062 = sand.u32 %s227, 1
        %s2063 = scalar_lea.vmem [#allocation7], %s2062
        // Predicated region
        $region65: #{tpu_custom_call.1} parent=55 // pred_check
          %p2064 = pneg %p237
        $region66: #{tpu_custom_call.1} parent=55 // pred_check_branch
          %2066 = sbr.rel (%p2064) target = $region68
        $region67: #{tpu_custom_call.1} parent=55 // pred_region
          %s2068 = ssub.s32 16, 16
          %2069 = vsyncadd %s2061, %s2068
          %s2070 = smul.addr %s25, 16
          %s2071 = scalar_lea.hbm %s9, %s2070
          %s2073 = sshll.u32 %s2063, 4
          %s2074 = int_to_ptr.vmem [resolvable:$true] %s2073
          %2076 = dma.vmem_to_hbm [thread:$0]  %s2074, 16, %s2071, %s2061
        $region68: #{tpu_custom_call.1} parent=55 // pred_fallthru
          _
      $region56: #{tpu_custom_call.1} parent=5 // pred_fallthru
        _
      %p2077 = scmp.le.s32.totalorder 2, %s20
      // Predicated region
      $region69: #{tpu_custom_call.1} parent=5 // pred_check
        %p2078 = pneg %p2077
      $region70: #{tpu_custom_call.1} parent=5 // pred_check_branch
        %2080 = sbr.rel (%p2078) target = $region72
      $region71: #{tpu_custom_call.1} parent=5 // pred_region
        %s2081 = ssub.s32 %s20, 2
        // Predicated region
        $region73: #{tpu_custom_call.1} parent=71 // pred_check
          %p2082 = pneg %p243
        $region74: #{tpu_custom_call.1} parent=71 // pred_check_branch
          %2084 = sbr.rel (%p2082) target = $region76
        $region75: #{tpu_custom_call.1} parent=71 // pred_region
          %s2085 = sand.u32 %s228, 1
          %s2086 = scalar_lea.sflag [#allocation4], %s2085
          %s2087 = sand.u32 %s228, 1
          %s2088 = scalar_lea.vmem [#allocation7], %s2087
          %2089 = dma.done %s2086, 16
        $region76: #{tpu_custom_call.1} parent=71 // pred_fallthru
          _
      $region72: #{tpu_custom_call.1} parent=5 // pred_fallthru
        _
    $region6: #{tpu_custom_call.1} parent=1 // loop_footer
      %s24 = sadd.s32 1, %s20
    $region7: #{tpu_custom_call.1} parent=1 // loop_footer_branch
      %19 = sbr.rel target = $region3
    $region8: #{tpu_custom_call.1} parent=1 // loop_exit
      _
    %2090 = vsyncpa [#allocation3], 1
    %s2091 = scalar_lea.sflag [#allocation3], 1
    %2092 = vsyncpa %s2091, 1
    %2093 = vsyncpa [#allocation6], 1
    %2094 = vsyncpa [#allocation4], 1
    %s2095 = scalar_lea.sflag [#allocation4], 1
    %2096 = vsyncpa %s2095, 1

</llo_original>
